<compile_context>
chip_gen: v7x
topology: tpu7x:2x2x1
jax: 0.10.0
libtpu: 0.0.40
codegen_flags: <defaults>
</compile_context>

<pallas_src>
import functools

import jax
import jax.numpy as jnp
from jax.experimental import pallas as pl
from jax.experimental.pallas import tpu as pltpu


def _round_up(x, m):
    return ((x + m - 1) // m) * m


def _dot_edge_kernel(edge_ref, zt_ref, out_ref, acc_ref, *, apply_sigmoid):
    # edge_ref: (1, 2*TE)       int32   -- lane-dense [src_block | dst_block]
    # zt_ref:   (D, n_chunk)    z.dtype -- one node-chunk of the transposed table
    # out_ref:  (1, TE)         z.dtype -- lane-dense per-edge scores
    # acc_ref:  (D, 2*TE)       f32     -- gathered-endpoint accumulator (over chunks)
    k = pl.program_id(1)
    n_chunks = pl.num_programs(1)

    @pl.when(k == 0)
    def _init():
        acc_ref[...] = jnp.zeros_like(acc_ref)

    idx = edge_ref[...]                                   # (1, 2*TE) int32
    zt = zt_ref[...]                                      # (D, n_chunk)
    n_chunk = zt.shape[1]

    # Chunk-local one-hot: sublane iota (n_chunk, 1) broadcast-compared against
    # the lane-dense index row.  No full (n_chunk, 2*TE) int32 iota is built;
    # only the one-hot in z's dtype feeds the MXU.
    local_ids = jax.lax.broadcasted_iota(jnp.int32, (n_chunk, 1), 0) + k * n_chunk
    onehot = (local_ids == idx).astype(zt.dtype)          # (n_chunk, 2*TE)

    # Partial fused gather of both endpoints for this node chunk, f32 accumulate.
    acc_ref[...] += jnp.dot(zt, onehot, preferred_element_type=jnp.float32)

    @pl.when(k == n_chunks - 1)
    def _finalize():
        g = acc_ref[...]                                  # (D, 2*TE) f32
        te = g.shape[1] // 2
        z_src = g[:, :te]
        z_dst = g[:, te:]
        # Per-edge dot product: elementwise product + sublane (feature) reduce
        # keeps the result lane-dense -> full-width unmasked store.
        score = jnp.sum(z_src * z_dst, axis=0, keepdims=True)   # (1, TE) f32
        if apply_sigmoid:
            score = jax.nn.sigmoid(score)
        out_ref[...] = score.astype(out_ref.dtype)


def dot_edge_decoder(z, edge, sigmoid=True, block_e=None, max_n_chunk=2048):
    """z: [N, D] float; edge: [2, E] int; returns [E] float (z.dtype)."""
    n, d = z.shape
    e = edge.shape[1]
    assert e > 0
    itemsize = jnp.dtype(z.dtype).itemsize

    # ---- node-dim (matmul K) chunking --------------------------------------
    assert max_n_chunk % 128 == 0
    n_chunk = min(_round_up(n, 128), max_n_chunk)
    n_pad = _round_up(n, n_chunk)
    num_n_chunks = n_pad // n_chunk

    # ---- edge blocking ------------------------------------------------------
    if block_e is None:
        # Largest block whose per-step intermediates (one-hot + f32 accumulator)
        # stay under a conservative budget (sized with v7x's 64 MiB VMEM in mind).
        budget = 8 * 1024 * 1024
        block_e = 128
        for cand in (1024, 512, 256, 128):
            if n_chunk * 2 * cand * itemsize + d * 2 * cand * 4 <= budget:
                block_e = cand
                break
    assert block_e % 128 == 0, "block_e must be a multiple of 128 (lane width)"
    e_pad = _round_up(e, block_e)
    num_e_blocks = e_pad // block_e

    # ---- wrapper-side layout plumbing (cheap XLA ops, not kernel work) ------
    edge_i32 = edge.astype(jnp.int32)
    if e_pad != e:
        edge_i32 = jnp.pad(edge_i32, ((0, 0), (0, e_pad - e)))   # pad -> node 0
    # One lane-dense row; edge block i occupies columns
    # [i*2*block_e, (i+1)*2*block_e) as [src_block_i | dst_block_i].
    edge_rows = (edge_i32.reshape(2, num_e_blocks, block_e)
                 .transpose(1, 0, 2)
                 .reshape(1, num_e_blocks * 2 * block_e))
    # Transposed node table, lane-padded to a multiple of the chunk size
    # (padded columns are zero, so they never contribute).
    zt = z.T                                                      # (D, N)
    if n_pad != n:
        zt = jnp.pad(zt, ((0, 0), (0, n_pad - n)))

    # ---- derived VMEM budget -------------------------------------------------
    zt_buffers = 1 if num_n_chunks == 1 else 2
    need = (d * n_chunk * itemsize * zt_buffers              # zt block(s)
            + 2 * 2 * block_e * 4                            # edge blocks (2 bufs)
            + 2 * block_e * itemsize                         # out blocks (2 bufs)
            + d * 2 * block_e * 4                            # f32 accumulator
            + n_chunk * 2 * block_e * itemsize               # one-hot intermediate
            + d * 2 * block_e * 4)                           # matmul result
    try:
        vmem_cap = int(pltpu.get_tpu_info().vmem_capacity_bytes)
    except Exception:
        vmem_cap = 64 * 1024 * 1024                          # conservative (v7x)
    vmem_limit = max(16 * 1024 * 1024, min(2 * need, int(vmem_cap * 0.9)))

    cost = pl.CostEstimate(
        flops=2 * d * n_pad * 2 * e_pad + 2 * d * e_pad,
        transcendentals=e_pad if sigmoid else 0,
        bytes_accessed=(num_e_blocks * d * n_pad * itemsize
                        + 2 * e_pad * 4 + e_pad * itemsize),
    )

    # Single-buffer the node table when it is fully resident (constant index
    # map -> default double-buffering would just duplicate the whole slab);
    # keep default double-buffering when streaming chunks so DMA overlaps MXU.
    if num_n_chunks == 1:
        zt_spec = pl.BlockSpec((d, n_chunk), lambda i, k: (0, k),
                               pipeline_mode=pl.Buffered(1))
    else:
        zt_spec = pl.BlockSpec((d, n_chunk), lambda i, k: (0, k))

    out = pl.pallas_call(
        functools.partial(_dot_edge_kernel, apply_sigmoid=sigmoid),
        out_shape=jax.ShapeDtypeStruct((1, e_pad), z.dtype),
        grid_spec=pltpu.PrefetchScalarGridSpec(
            num_scalar_prefetch=0,
            grid=(num_e_blocks, num_n_chunks),
            in_specs=[
                pl.BlockSpec((1, 2 * block_e), lambda i, k: (0, i)),  # edge row
                zt_spec,                                              # z.T chunk
            ],
            out_specs=pl.BlockSpec((1, block_e), lambda i, k: (0, i)),
            scratch_shapes=[pltpu.VMEM((d, 2 * block_e), jnp.float32)],
        ),
        compiler_params=pltpu.CompilerParams(
            dimension_semantics=("parallel", "arbitrary"),
            vmem_limit_bytes=vmem_limit,
        ),
        cost_estimate=cost,
    )(edge_rows, zt)
    return out[0, :e]


def dot_edge_decoder_ref(z, edge, sigmoid=True):
    x = z[edge[0]] * z[edge[1]]
    x = x.sum(-1)
    return jax.nn.sigmoid(x) if sigmoid else x


if __name__ == "__main__":
    key = jax.random.PRNGKey(0)
    k_z, k_e, k_z2, k_e2 = jax.random.split(key, 4)

    # Ragged E (not a multiple of block_e) exercises the edge-padding path.
    num_nodes, hidden, num_edges = 16, 32, 300
    z = jax.random.normal(k_z, (num_nodes, hidden), dtype=jnp.float32)
    edge = jax.random.randint(k_e, (2, num_edges), 0, num_nodes, dtype=jnp.int32)

    # 1) Sigmoid path, auto block_e (single edge block, single node chunk,
    #    single-buffered resident table).
    out = jax.block_until_ready(dot_edge_decoder(z, edge, sigmoid=True))
    ref = dot_edge_decoder_ref(z, edge, sigmoid=True)
    assert out.shape == (num_edges,)
    assert jnp.allclose(out, ref, atol=1e-5, rtol=1e-5), "sigmoid path mismatch"

    # 2) Raw-score path, multi edge-block grid (block_e=128 -> 3 grid steps).
    out_raw = jax.block_until_ready(
        dot_edge_decoder(z, edge, sigmoid=False, block_e=128))
    ref_raw = dot_edge_decoder_ref(z, edge, sigmoid=False)
    assert jnp.allclose(out_raw, ref_raw, atol=1e-4, rtol=1e-4), "raw path mismatch"

    # 3) bf16 table: bf16 z + bf16 one-hots on the MXU, f32 accumulation.
    z_bf16 = z.astype(jnp.bfloat16)
    out_bf16 = jax.block_until_ready(dot_edge_decoder(z_bf16, edge, sigmoid=True))
    ref_bf16 = dot_edge_decoder_ref(z_bf16.astype(jnp.float32), edge, sigmoid=True)
    assert jnp.allclose(out_bf16.astype(jnp.float32), ref_bf16,
                        atol=5e-2, rtol=5e-2), "bf16 path mismatch"

    # 4) Node-chunked (K-tiled) gather path: 300 nodes with max_n_chunk=128
    #    -> 3 node chunks streamed through the f32 accumulator.
    num_nodes2 = 300
    z2 = jax.random.normal(k_z2, (num_nodes2, hidden), dtype=jnp.float32)
    edge2 = jax.random.randint(k_e2, (2, num_edges), 0, num_nodes2, dtype=jnp.int32)
    out2 = jax.block_until_ready(
        dot_edge_decoder(z2, edge2, sigmoid=False, block_e=128, max_n_chunk=128))
    ref2 = dot_edge_decoder_ref(z2, edge2, sigmoid=False)
    assert jnp.allclose(out2, ref2, atol=1e-4, rtol=1e-4), "chunked path mismatch"

    print("KERNEL_OK")
</pallas_src>

<mosaic_0001>
module attributes {stable_mosaic.version = 11 : i64} {
  func.func @_dot_edge_kernel(%arg0: i32, %arg1: i32, %arg2: memref<1x2048xi32, #tpu.memory_space<vmem>>, %arg3: memref<32x128xf32, #tpu.memory_space<vmem>>, %arg4: memref<1x1024xf32, #tpu.memory_space<vmem>>, %arg5: memref<32x2048xf32, #tpu.memory_space<vmem>>) attributes {dimension_semantics = [#tpu.dimension_semantics<parallel>, #tpu.dimension_semantics<arbitrary>], iteration_bounds = array<i64: 1, 1>, scalar_prefetch = 0 : i64, scratch_operands = 1 : i64, tpu.core_type = #tpu.core_type<tc>, window_params = [{transform_indices = @transform_0, window_bounds = array<i64: 1, 2048>}, {pipeline_mode = #tpu.pipeline_mode<synchronous>, transform_indices = @transform_1, window_bounds = array<i64: 32, 128>}, {transform_indices = @transform_2, window_bounds = array<i64: 1, 1024>}]} {
    %c0_i32 = arith.constant 0 : i32
    %0 = arith.cmpi eq, %arg1, %c0_i32 : i32
    %1 = arith.extui %0 : i1 to i32
    %c0_i32_0 = arith.constant 0 : i32
    %2 = arith.cmpi ne, %1, %c0_i32_0 : i32
    scf.if %2 {
      %cst_10 = arith.constant 0.000000e+00 : f32
      %21 = vector.broadcast %cst_10 : f32 to vector<32x2048xf32>
      %c0_11 = arith.constant 0 : index
      %c0_12 = arith.constant 0 : index
      %22 = vector.load %arg5[%c0_11, %c0_12] : memref<32x2048xf32, #tpu.memory_space<vmem>>, vector<32x2048xf32>
      tpu.vector_store %arg5[%c0_11, %c0_12], %21 {strides = array<i32>} : memref<32x2048xf32, #tpu.memory_space<vmem>>, vector<32x2048xf32>,
    } else {
    }
    %c0 = arith.constant 0 : index
    %c0_1 = arith.constant 0 : index
    %3 = vector.load %arg2[%c0, %c0_1] : memref<1x2048xi32, #tpu.memory_space<vmem>>, vector<1x2048xi32>
    %c0_2 = arith.constant 0 : index
    %c0_3 = arith.constant 0 : index
    %4 = vector.load %arg3[%c0_2, %c0_3] : memref<32x128xf32, #tpu.memory_space<vmem>>, vector<32x128xf32>
    %5 = tpu.iota {dimensions = array<i32: 0>} : vector<128x1xi32>
    %c128_i32 = arith.constant 128 : i32
    %6 = arith.muli %arg1, %c128_i32 : i32
    %7 = vector.broadcast %6 : i32 to vector<128x1xi32>
    %8 = arith.addi %5, %7 : vector<128x1xi32>
    %9 = vector.broadcast %8 : vector<128x1xi32> to vector<128x2048xi32>
    %10 = vector.broadcast %3 : vector<1x2048xi32> to vector<128x2048xi32>
    %11 = arith.cmpi eq, %9, %10 : vector<128x2048xi32>
    %12 = arith.extui %11 : vector<128x2048xi1> to vector<128x2048xi32>
    %13 = arith.sitofp %12 : vector<128x2048xi32> to vector<128x2048xf32>
    %c0_4 = arith.constant 0 : index
    %c0_5 = arith.constant 0 : index
    %14 = vector.load %arg5[%c0_4, %c0_5] : memref<32x2048xf32, #tpu.memory_space<vmem>>, vector<32x2048xf32>
    %cst = arith.constant dense<0.000000e+00> : vector<32x2048xf32>
    %15 = tpu.matmul %4, %13, %cst {dimension_numbers = #tpu.dot_dimension_numbers<[1], [0], [0], [1], [0, 0, 1, 1], [], []>} : vector<32x128xf32>, vector<128x2048xf32>, vector<32x2048xf32> -> vector<32x2048xf32>
    %16 = arith.addf %14, %15 : vector<32x2048xf32>
    %c0_6 = arith.constant 0 : index
    %c0_7 = arith.constant 0 : index
    %17 = vector.load %arg5[%c0_6, %c0_7] : memref<32x2048xf32, #tpu.memory_space<vmem>>, vector<32x2048xf32>
    tpu.vector_store %arg5[%c0_6, %c0_7], %16 {strides = array<i32>} : memref<32x2048xf32, #tpu.memory_space<vmem>>, vector<32x2048xf32>,
    %c0_i32_8 = arith.constant 0 : i32
    %18 = arith.cmpi eq, %arg1, %c0_i32_8 : i32
    %19 = arith.extui %18 : i1 to i32
    %c0_i32_9 = arith.constant 0 : i32
    %20 = arith.cmpi ne, %19, %c0_i32_9 : i32
    scf.if %20 {
      %c0_10 = arith.constant 0 : index
      %c0_11 = arith.constant 0 : index
      %21 = vector.load %arg5[%c0_10, %c0_11] : memref<32x2048xf32, #tpu.memory_space<vmem>>, vector<32x2048xf32>
      %22 = vector.extract_strided_slice %21 {offsets = [0, 0], sizes = [32, 1024], strides = [1, 1]} : vector<32x2048xf32> to vector<32x1024xf32>
      %23 = vector.extract_strided_slice %21 {offsets = [0, 1024], sizes = [32, 1024], strides = [1, 1]} : vector<32x2048xf32> to vector<32x1024xf32>
      %24 = arith.mulf %22, %23 : vector<32x1024xf32>
      %cst_12 = arith.constant dense<0.000000e+00> : vector<1024xf32>
      %25 = vector.multi_reduction <add>, %24, %cst_12 [0] : vector<32x1024xf32> to vector<1024xf32>
      %26 = vector.shape_cast %25 : vector<1024xf32> to vector<1x1024xf32>
      %27 = arith.negf %26 : vector<1x1024xf32>
      %28 = math.exp %27 : vector<1x1024xf32>
      %cst_13 = arith.constant 1.000000e+00 : f32
      %29 = vector.broadcast %cst_13 : f32 to vector<1x1024xf32>
      %30 = arith.addf %29, %28 : vector<1x1024xf32>
      %31 = arith.divf %29, %30 : vector<1x1024xf32>
      %c0_14 = arith.constant 0 : index
      %c0_15 = arith.constant 0 : index
      %32 = vector.load %arg4[%c0_14, %c0_15] : memref<1x1024xf32, #tpu.memory_space<vmem>>, vector<1x1024xf32>
      tpu.vector_store %arg4[%c0_14, %c0_15], %31 {strides = array<i32>} : memref<1x1024xf32, #tpu.memory_space<vmem>>, vector<1x1024xf32>,
    } else {
    }
    return
  }
  func.func @transform_0(%arg0: i32, %arg1: i32) -> (i32, i32) {
    %c0_i32 = arith.constant 0 : i32
    %c0_i32_0 = arith.constant 0 : i32
    return %c0_i32, %arg0 : i32, i32
  }
  func.func @transform_1(%arg0: i32, %arg1: i32) -> (i32, i32) {
    %c0_i32 = arith.constant 0 : i32
    %c0_i32_0 = arith.constant 0 : i32
    return %c0_i32, %arg1 : i32, i32
  }
  func.func @transform_2(%arg0: i32, %arg1: i32) -> (i32, i32) {
    %c0_i32 = arith.constant 0 : i32
    %c0_i32_0 = arith.constant 0 : i32
    return %c0_i32, %arg0 : i32, i32
  }
}

</mosaic_0001>

<llo_original>
// kernel: tpu_custom_call.1
$region0: #{tpu_custom_call.1}
  #allocation0 [shape = 'u32[]', space=smem, size = 0x4, offset = 0x4, fixed_abs, tag = 'smem constant byte address 0x4 - core index']
  #allocation1 [shape = 'u32[144,128]{1,0:T(1,128)}', space=vmem, size = 0x12000, scoped, tag = 'internal scratch']
  #allocation2 [shape = 'f32[32,2048]{1,0:T(8,128)}', space=vmem, size = 0x40000, scoped, tag = 'scratch operand']
  %s0 = inlined_call_operand.hbm [shape: s32[1,2048], index: 0, kind: input, shape index: {}]
  %s1 = inlined_call_operand.hbm [shape: f32[32,128], index: 1, kind: input, shape index: {}]
  %s2 = inlined_call_operand.hbm [shape: f32[1,1024], index: 2, kind: output, shape index: {}]
  %s3 = sld [smem:[#allocation0]]
  $region34: #{tpu_custom_call.1} parent=0
    _
  %s5 = ssub.s32 1, %s3
  %s6 = scalar_select 0, %s5, %s3
  $region1: #{tpu_custom_call.1} parent=0
    #allocation3 [shape = 'u8[8192]{0}', space=vmem, size = 0x2000, scoped, tag = 'input window, operand 0, single buffered']
    #allocation4 [shape = 's32[1]{0}', space=sflag, size = 0x4, scoped, tag = 'scoped memory for tpu_custom_call.1']
    #allocation5 [shape = 's32[1]{0}', space=sflag, size = 0x4, scoped, tag = 'scoped memory for tpu_custom_call.1']
    #allocation6 [shape = 'u8[16384]{0}', space=vmem, size = 0x4000, scoped, tag = 'input window, operand 1, single buffered']
    #allocation7 [shape = 's32[1]{0}', space=sflag, size = 0x4, scoped, tag = 'scoped memory for tpu_custom_call.1']
    #allocation8 [shape = 'u8[4096]{0}', space=vmem, size = 0x1000, scoped, tag = 'output window, operand 0, single buffered']
    %7 = vsyncpa [#allocation4], 0
    %8 = vsyncpa [#allocation7], 0
    %9 = vsyncpa [#allocation5], 0
    // Predicated region
    $region2: #{tpu_custom_call.1} parent=1 // pred_check
      _
    $region3: #{tpu_custom_call.1} parent=1 // pred_check_branch
      %11 = sbr.rel (0) target = $region5
    $region4: #{tpu_custom_call.1} parent=1 // pred_region
      %s13 = ssub.s32 256, 256
      %14 = vsyncadd [#allocation4], %s13
      %s16 = sshll.u32 [#allocation3], 4
      %s17 = int_to_ptr.vmem [resolvable:$true] %s16
      %19 = dma.hbm_to_vmem [thread:$0]  %s0, 256, %s17, [#allocation4]
    $region5: #{tpu_custom_call.1} parent=1 // pred_fallthru
      _
    // Predicated region
    $region6: #{tpu_custom_call.1} parent=1 // pred_check
      _
    $region7: #{tpu_custom_call.1} parent=1 // pred_check_branch
      %21 = sbr.rel (0) target = $region9
    $region8: #{tpu_custom_call.1} parent=1 // pred_region
      %s23 = ssub.s32 512, 512
      %24 = vsyncadd [#allocation7], %s23
      %s25 = sshll.u32 [#allocation6], 4
      %s26 = int_to_ptr.vmem [resolvable:$true] %s25
      %31 = dma.hbm_to_vmem [thread:$0]  %s1, 512, %s26, [#allocation7], 128, 128, 8
    $region9: #{tpu_custom_call.1} parent=1 // pred_fallthru
      _
    // Predicated region
    $region10: #{tpu_custom_call.1} parent=1 // pred_check
      _
    $region11: #{tpu_custom_call.1} parent=1 // pred_check_branch
      %33 = sbr.rel (0) target = $region13
    $region12: #{tpu_custom_call.1} parent=1 // pred_region
      %34 = dma.done [#allocation4], 256
    $region13: #{tpu_custom_call.1} parent=1 // pred_fallthru
      _
    // Predicated region
    $region14: #{tpu_custom_call.1} parent=1 // pred_check
      _
    $region15: #{tpu_custom_call.1} parent=1 // pred_check_branch
      %36 = sbr.rel (0) target = $region17
    $region16: #{tpu_custom_call.1} parent=1 // pred_region
      %37 = dma.done [#allocation7], 512
    $region17: #{tpu_custom_call.1} parent=1 // pred_fallthru
      _
    %p38 = scmp.eq.s32.totalorder 0, 0
    // Predicated region
    $region18: #{tpu_custom_call.1} parent=1 // pred_check
      %p39 = pneg %p38
    $region19: #{tpu_custom_call.1} parent=1 // pred_check_branch
      %41 = sbr.rel (%p39) target = $region21
    $region20: #{tpu_custom_call.1} parent=1 // pred_region
      %42 = vst [vmem:[#allocation2] sm:$0xff] 0.0
      %43 = vst [vmem:[#allocation2 + $0x8] sm:$0xff] 0.0
      %44 = vst [vmem:[#allocation2 + $0x10] sm:$0xff] 0.0
      %45 = vst [vmem:[#allocation2 + $0x18] sm:$0xff] 0.0
      %46 = vst [vmem:[#allocation2 + $0x20] sm:$0xff] 0.0
      %47 = vst [vmem:[#allocation2 + $0x28] sm:$0xff] 0.0
      %48 = vst [vmem:[#allocation2 + $0x30] sm:$0xff] 0.0
      %49 = vst [vmem:[#allocation2 + $0x38] sm:$0xff] 0.0
      %50 = vst [vmem:[#allocation2 + $0x40] sm:$0xff] 0.0
      %51 = vst [vmem:[#allocation2 + $0x48] sm:$0xff] 0.0
      %52 = vst [vmem:[#allocation2 + $0x50] sm:$0xff] 0.0
      %53 = vst [vmem:[#allocation2 + $0x58] sm:$0xff] 0.0
      %54 = vst [vmem:[#allocation2 + $0x60] sm:$0xff] 0.0
      %55 = vst [vmem:[#allocation2 + $0x68] sm:$0xff] 0.0
      %56 = vst [vmem:[#allocation2 + $0x70] sm:$0xff] 0.0
      %57 = vst [vmem:[#allocation2 + $0x78] sm:$0xff] 0.0
      %58 = vst [vmem:[#allocation2 + $0x80] sm:$0xff] 0.0
      %59 = vst [vmem:[#allocation2 + $0x88] sm:$0xff] 0.0
      %60 = vst [vmem:[#allocation2 + $0x90] sm:$0xff] 0.0
      %61 = vst [vmem:[#allocation2 + $0x98] sm:$0xff] 0.0
      %62 = vst [vmem:[#allocation2 + $0xa0] sm:$0xff] 0.0
      %63 = vst [vmem:[#allocation2 + $0xa8] sm:$0xff] 0.0
      %64 = vst [vmem:[#allocation2 + $0xb0] sm:$0xff] 0.0
      %65 = vst [vmem:[#allocation2 + $0xb8] sm:$0xff] 0.0
      %66 = vst [vmem:[#allocation2 + $0xc0] sm:$0xff] 0.0
      %67 = vst [vmem:[#allocation2 + $0xc8] sm:$0xff] 0.0
      %68 = vst [vmem:[#allocation2 + $0xd0] sm:$0xff] 0.0
      %69 = vst [vmem:[#allocation2 + $0xd8] sm:$0xff] 0.0
      %70 = vst [vmem:[#allocation2 + $0xe0] sm:$0xff] 0.0
      %71 = vst [vmem:[#allocation2 + $0xe8] sm:$0xff] 0.0
      %72 = vst [vmem:[#allocation2 + $0xf0] sm:$0xff] 0.0
      %73 = vst [vmem:[#allocation2 + $0xf8] sm:$0xff] 0.0
      %74 = vst [vmem:[#allocation2 + $0x100] sm:$0xff] 0.0
      %75 = vst [vmem:[#allocation2 + $0x108] sm:$0xff] 0.0
      %76 = vst [vmem:[#allocation2 + $0x110] sm:$0xff] 0.0
      %77 = vst [vmem:[#allocation2 + $0x118] sm:$0xff] 0.0
      %78 = vst [vmem:[#allocation2 + $0x120] sm:$0xff] 0.0
      %79 = vst [vmem:[#allocation2 + $0x128] sm:$0xff] 0.0
      %80 = vst [vmem:[#allocation2 + $0x130] sm:$0xff] 0.0
      %81 = vst [vmem:[#allocation2 + $0x138] sm:$0xff] 0.0
      %82 = vst [vmem:[#allocation2 + $0x140] sm:$0xff] 0.0
      %83 = vst [vmem:[#allocation2 + $0x148] sm:$0xff] 0.0
      %84 = vst [vmem:[#allocation2 + $0x150] sm:$0xff] 0.0
      %85 = vst [vmem:[#allocation2 + $0x158] sm:$0xff] 0.0
      %86 = vst [vmem:[#allocation2 + $0x160] sm:$0xff] 0.0
      %87 = vst [vmem:[#allocation2 + $0x168] sm:$0xff] 0.0
      %88 = vst [vmem:[#allocation2 + $0x170] sm:$0xff] 0.0
      %89 = vst [vmem:[#allocation2 + $0x178] sm:$0xff] 0.0
      %90 = vst [vmem:[#allocation2 + $0x180] sm:$0xff] 0.0
      %91 = vst [vmem:[#allocation2 + $0x188] sm:$0xff] 0.0
      %92 = vst [vmem:[#allocation2 + $0x190] sm:$0xff] 0.0
      %93 = vst [vmem:[#allocation2 + $0x198] sm:$0xff] 0.0
      %94 = vst [vmem:[#allocation2 + $0x1a0] sm:$0xff] 0.0
      %95 = vst [vmem:[#allocation2 + $0x1a8] sm:$0xff] 0.0
      %96 = vst [vmem:[#allocation2 + $0x1b0] sm:$0xff] 0.0
      %97 = vst [vmem:[#allocation2 + $0x1b8] sm:$0xff] 0.0
      %98 = vst [vmem:[#allocation2 + $0x1c0] sm:$0xff] 0.0
      %99 = vst [vmem:[#allocation2 + $0x1c8] sm:$0xff] 0.0
      %100 = vst [vmem:[#allocation2 + $0x1d0] sm:$0xff] 0.0
      %101 = vst [vmem:[#allocation2 + $0x1d8] sm:$0xff] 0.0
      %102 = vst [vmem:[#allocation2 + $0x1e0] sm:$0xff] 0.0
      %103 = vst [vmem:[#allocation2 + $0x1e8] sm:$0xff] 0.0
      %104 = vst [vmem:[#allocation2 + $0x1f0] sm:$0xff] 0.0
      %105 = vst [vmem:[#allocation2 + $0x1f8] sm:$0xff] 0.0
    $region21: #{tpu_custom_call.1} parent=1 // pred_fallthru
      _
    %v106 = vld [vmem:[#allocation3] sm:$0xff]
    %v107 = vld [vmem:[#allocation3 + $0x8] sm:$0xff]
    %v108 = vld [vmem:[#allocation6] sm:$0xff]
    %v109 = vld [vmem:[#allocation6 + $0x8] sm:$0xff]
    %v110 = vld [vmem:[#allocation6 + $0x10] sm:$0xff]
    %v111 = vld [vmem:[#allocation6 + $0x18] sm:$0xff]
    %v112 = vlaneseq
    %v113 = vshrl.u32 %v112, 7
    %v114 = vadd.s32 %v113, 8
    %v115 = vadd.s32 %v113, 16
    %v116 = vadd.s32 %v113, 24
    %v117 = vadd.s32 %v113, 32
    %v118 = vadd.s32 %v113, 40
    %v119 = vadd.s32 %v113, 48
    %v120 = vadd.s32 %v113, 56
    %v121 = vadd.s32 %v113, 64
    %v122 = vadd.s32 %v113, 72
    %v123 = vadd.s32 %v113, 80
    %v124 = vadd.s32 %v113, 88
    %v125 = vadd.s32 %v113, 96
    %v126 = vadd.s32 %v113, 104
    %v127 = vadd.s32 %v113, 112
    %v128 = vadd.s32 %v113, 120
    %s129 = smul.u32 0, 128
    %v130 = vstv %s129
    %v131 = vadd.s32 %v113, %v130
    %v132 = vadd.s32 %v114, %v130
    %v133 = vadd.s32 %v115, %v130
    %v134 = vadd.s32 %v116, %v130
    %v135 = vadd.s32 %v117, %v130
    %v136 = vadd.s32 %v118, %v130
    %v137 = vadd.s32 %v119, %v130
    %v138 = vadd.s32 %v120, %v130
    %v139 = vadd.s32 %v121, %v130
    %v140 = vadd.s32 %v122, %v130
    %v141 = vadd.s32 %v123, %v130
    %v142 = vadd.s32 %v124, %v130
    %v143 = vadd.s32 %v125, %v130
    %v144 = vadd.s32 %v126, %v130
    %v145 = vadd.s32 %v127, %v130
    %v146 = vadd.s32 %v128, %v130
    %v147 = vlaneseq
    %v148 = vshrl.u32 %v147, 7
    %v149 = vsub.s32 0, %v148
    %v150 = vrot.slane %v106, %v149
    %v151 = vlaneseq
    %v152 = vshrl.u32 %v151, 7
    %v153 = vsub.s32 1, %v152
    %v154 = vrot.slane %v106, %v153
    %v155 = vlaneseq
    %v156 = vshrl.u32 %v155, 7
    %v157 = vsub.s32 2, %v156
    %v158 = vrot.slane %v106, %v157
    %v159 = vlaneseq
    %v160 = vshrl.u32 %v159, 7
    %v161 = vsub.s32 3, %v160
    %v162 = vrot.slane %v106, %v161
    %v163 = vlaneseq
    %v164 = vshrl.u32 %v163, 7
    %v165 = vsub.s32 4, %v164
    %v166 = vrot.slane %v106, %v165
    %v167 = vlaneseq
    %v168 = vshrl.u32 %v167, 7
    %v169 = vsub.s32 5, %v168
    %v170 = vrot.slane %v106, %v169
    %v171 = vlaneseq
    %v172 = vshrl.u32 %v171, 7
    %v173 = vsub.s32 6, %v172
    %v174 = vrot.slane %v106, %v173
    %v175 = vlaneseq
    %v176 = vshrl.u32 %v175, 7
    %v177 = vsub.s32 7, %v176
    %v178 = vrot.slane %v106, %v177
    %v179 = vlaneseq
    %v180 = vshrl.u32 %v179, 7
    %v181 = vsub.s32 0, %v180
    %v182 = vrot.slane %v107, %v181
    %v183 = vlaneseq
    %v184 = vshrl.u32 %v183, 7
    %v185 = vsub.s32 1, %v184
    %v186 = vrot.slane %v107, %v185
    %v187 = vlaneseq
    %v188 = vshrl.u32 %v187, 7
    %v189 = vsub.s32 2, %v188
    %v190 = vrot.slane %v107, %v189
    %v191 = vlaneseq
    %v192 = vshrl.u32 %v191, 7
    %v193 = vsub.s32 3, %v192
    %v194 = vrot.slane %v107, %v193
    %v195 = vlaneseq
    %v196 = vshrl.u32 %v195, 7
    %v197 = vsub.s32 4, %v196
    %v198 = vrot.slane %v107, %v197
    %v199 = vlaneseq
    %v200 = vshrl.u32 %v199, 7
    %v201 = vsub.s32 5, %v200
    %v202 = vrot.slane %v107, %v201
    %v203 = vlaneseq
    %v204 = vshrl.u32 %v203, 7
    %v205 = vsub.s32 6, %v204
    %v206 = vrot.slane %v107, %v205
    %v207 = vlaneseq
    %v208 = vshrl.u32 %v207, 7
    %v209 = vsub.s32 7, %v208
    %v210 = vrot.slane %v107, %v209
    %vm211 = vcmp.eq.s32.totalorder %v131, %v150
    %vm212 = vcmp.eq.s32.totalorder %v131, %v154
    %vm213 = vcmp.eq.s32.totalorder %v131, %v158
    %vm214 = vcmp.eq.s32.totalorder %v131, %v162
    %vm215 = vcmp.eq.s32.totalorder %v131, %v166
    %vm216 = vcmp.eq.s32.totalorder %v131, %v170
    %vm217 = vcmp.eq.s32.totalorder %v131, %v174
    %vm218 = vcmp.eq.s32.totalorder %v131, %v178
    %vm219 = vcmp.eq.s32.totalorder %v131, %v182
    %vm220 = vcmp.eq.s32.totalorder %v131, %v186
    %vm221 = vcmp.eq.s32.totalorder %v131, %v190
    %vm222 = vcmp.eq.s32.totalorder %v131, %v194
    %vm223 = vcmp.eq.s32.totalorder %v131, %v198
    %vm224 = vcmp.eq.s32.totalorder %v131, %v202
    %vm225 = vcmp.eq.s32.totalorder %v131, %v206
    %vm226 = vcmp.eq.s32.totalorder %v131, %v210
    %vm227 = vcmp.eq.s32.totalorder %v132, %v150
    %vm228 = vcmp.eq.s32.totalorder %v132, %v154
    %vm229 = vcmp.eq.s32.totalorder %v132, %v158
    %vm230 = vcmp.eq.s32.totalorder %v132, %v162
    %vm231 = vcmp.eq.s32.totalorder %v132, %v166
    %vm232 = vcmp.eq.s32.totalorder %v132, %v170
    %vm233 = vcmp.eq.s32.totalorder %v132, %v174
    %vm234 = vcmp.eq.s32.totalorder %v132, %v178
    %vm235 = vcmp.eq.s32.totalorder %v132, %v182
    %vm236 = vcmp.eq.s32.totalorder %v132, %v186
    %vm237 = vcmp.eq.s32.totalorder %v132, %v190
    %vm238 = vcmp.eq.s32.totalorder %v132, %v194
    %vm239 = vcmp.eq.s32.totalorder %v132, %v198
    %vm240 = vcmp.eq.s32.totalorder %v132, %v202
    %vm241 = vcmp.eq.s32.totalorder %v132, %v206
    %vm242 = vcmp.eq.s32.totalorder %v132, %v210
    %vm243 = vcmp.eq.s32.totalorder %v133, %v150
    %vm244 = vcmp.eq.s32.totalorder %v133, %v154
    %vm245 = vcmp.eq.s32.totalorder %v133, %v158
    %vm246 = vcmp.eq.s32.totalorder %v133, %v162
    %vm247 = vcmp.eq.s32.totalorder %v133, %v166
    %vm248 = vcmp.eq.s32.totalorder %v133, %v170
    %vm249 = vcmp.eq.s32.totalorder %v133, %v174
    %vm250 = vcmp.eq.s32.totalorder %v133, %v178
    %vm251 = vcmp.eq.s32.totalorder %v133, %v182
    %vm252 = vcmp.eq.s32.totalorder %v133, %v186
    %vm253 = vcmp.eq.s32.totalorder %v133, %v190
    %vm254 = vcmp.eq.s32.totalorder %v133, %v194
    %vm255 = vcmp.eq.s32.totalorder %v133, %v198
    %vm256 = vcmp.eq.s32.totalorder %v133, %v202
    %vm257 = vcmp.eq.s32.totalorder %v133, %v206
    %vm258 = vcmp.eq.s32.totalorder %v133, %v210
    %vm259 = vcmp.eq.s32.totalorder %v134, %v150
    %vm260 = vcmp.eq.s32.totalorder %v134, %v154
    %vm261 = vcmp.eq.s32.totalorder %v134, %v158
    %vm262 = vcmp.eq.s32.totalorder %v134, %v162
    %vm263 = vcmp.eq.s32.totalorder %v134, %v166
    %vm264 = vcmp.eq.s32.totalorder %v134, %v170
    %vm265 = vcmp.eq.s32.totalorder %v134, %v174
    %vm266 = vcmp.eq.s32.totalorder %v134, %v178
    %vm267 = vcmp.eq.s32.totalorder %v134, %v182
    %vm268 = vcmp.eq.s32.totalorder %v134, %v186
    %vm269 = vcmp.eq.s32.totalorder %v134, %v190
    %vm270 = vcmp.eq.s32.totalorder %v134, %v194
    %vm271 = vcmp.eq.s32.totalorder %v134, %v198
    %vm272 = vcmp.eq.s32.totalorder %v134, %v202
    %vm273 = vcmp.eq.s32.totalorder %v134, %v206
    %vm274 = vcmp.eq.s32.totalorder %v134, %v210
    %vm275 = vcmp.eq.s32.totalorder %v135, %v150
    %vm276 = vcmp.eq.s32.totalorder %v135, %v154
    %vm277 = vcmp.eq.s32.totalorder %v135, %v158
    %vm278 = vcmp.eq.s32.totalorder %v135, %v162
    %vm279 = vcmp.eq.s32.totalorder %v135, %v166
    %vm280 = vcmp.eq.s32.totalorder %v135, %v170
    %vm281 = vcmp.eq.s32.totalorder %v135, %v174
    %vm282 = vcmp.eq.s32.totalorder %v135, %v178
    %vm283 = vcmp.eq.s32.totalorder %v135, %v182
    %vm284 = vcmp.eq.s32.totalorder %v135, %v186
    %vm285 = vcmp.eq.s32.totalorder %v135, %v190
    %vm286 = vcmp.eq.s32.totalorder %v135, %v194
    %vm287 = vcmp.eq.s32.totalorder %v135, %v198
    %vm288 = vcmp.eq.s32.totalorder %v135, %v202
    %vm289 = vcmp.eq.s32.totalorder %v135, %v206
    %vm290 = vcmp.eq.s32.totalorder %v135, %v210
    %vm291 = vcmp.eq.s32.totalorder %v136, %v150
    %vm292 = vcmp.eq.s32.totalorder %v136, %v154
    %vm293 = vcmp.eq.s32.totalorder %v136, %v158
    %vm294 = vcmp.eq.s32.totalorder %v136, %v162
    %vm295 = vcmp.eq.s32.totalorder %v136, %v166
    %vm296 = vcmp.eq.s32.totalorder %v136, %v170
    %vm297 = vcmp.eq.s32.totalorder %v136, %v174
    %vm298 = vcmp.eq.s32.totalorder %v136, %v178
    %vm299 = vcmp.eq.s32.totalorder %v136, %v182
    %vm300 = vcmp.eq.s32.totalorder %v136, %v186
    %vm301 = vcmp.eq.s32.totalorder %v136, %v190
    %vm302 = vcmp.eq.s32.totalorder %v136, %v194
    %vm303 = vcmp.eq.s32.totalorder %v136, %v198
    %vm304 = vcmp.eq.s32.totalorder %v136, %v202
    %vm305 = vcmp.eq.s32.totalorder %v136, %v206
    %vm306 = vcmp.eq.s32.totalorder %v136, %v210
    %vm307 = vcmp.eq.s32.totalorder %v137, %v150
    %vm308 = vcmp.eq.s32.totalorder %v137, %v154
    %vm309 = vcmp.eq.s32.totalorder %v137, %v158
    %vm310 = vcmp.eq.s32.totalorder %v137, %v162
    %vm311 = vcmp.eq.s32.totalorder %v137, %v166
    %vm312 = vcmp.eq.s32.totalorder %v137, %v170
    %vm313 = vcmp.eq.s32.totalorder %v137, %v174
    %vm314 = vcmp.eq.s32.totalorder %v137, %v178
    %vm315 = vcmp.eq.s32.totalorder %v137, %v182
    %vm316 = vcmp.eq.s32.totalorder %v137, %v186
    %vm317 = vcmp.eq.s32.totalorder %v137, %v190
    %vm318 = vcmp.eq.s32.totalorder %v137, %v194
    %vm319 = vcmp.eq.s32.totalorder %v137, %v198
    %vm320 = vcmp.eq.s32.totalorder %v137, %v202
    %vm321 = vcmp.eq.s32.totalorder %v137, %v206
    %vm322 = vcmp.eq.s32.totalorder %v137, %v210
    %vm323 = vcmp.eq.s32.totalorder %v138, %v150
    %vm324 = vcmp.eq.s32.totalorder %v138, %v154
    %vm325 = vcmp.eq.s32.totalorder %v138, %v158
    %vm326 = vcmp.eq.s32.totalorder %v138, %v162
    %vm327 = vcmp.eq.s32.totalorder %v138, %v166
    %vm328 = vcmp.eq.s32.totalorder %v138, %v170
    %vm329 = vcmp.eq.s32.totalorder %v138, %v174
    %vm330 = vcmp.eq.s32.totalorder %v138, %v178
    %vm331 = vcmp.eq.s32.totalorder %v138, %v182
    %vm332 = vcmp.eq.s32.totalorder %v138, %v186
    %vm333 = vcmp.eq.s32.totalorder %v138, %v190
    %vm334 = vcmp.eq.s32.totalorder %v138, %v194
    %vm335 = vcmp.eq.s32.totalorder %v138, %v198
    %vm336 = vcmp.eq.s32.totalorder %v138, %v202
    %vm337 = vcmp.eq.s32.totalorder %v138, %v206
    %vm338 = vcmp.eq.s32.totalorder %v138, %v210
    %vm339 = vcmp.eq.s32.totalorder %v139, %v150
    %vm340 = vcmp.eq.s32.totalorder %v139, %v154
    %vm341 = vcmp.eq.s32.totalorder %v139, %v158
    %vm342 = vcmp.eq.s32.totalorder %v139, %v162
    %vm343 = vcmp.eq.s32.totalorder %v139, %v166
    %vm344 = vcmp.eq.s32.totalorder %v139, %v170
    %vm345 = vcmp.eq.s32.totalorder %v139, %v174
    %vm346 = vcmp.eq.s32.totalorder %v139, %v178
    %vm347 = vcmp.eq.s32.totalorder %v139, %v182
    %vm348 = vcmp.eq.s32.totalorder %v139, %v186
    %vm349 = vcmp.eq.s32.totalorder %v139, %v190
    %vm350 = vcmp.eq.s32.totalorder %v139, %v194
    %vm351 = vcmp.eq.s32.totalorder %v139, %v198
    %vm352 = vcmp.eq.s32.totalorder %v139, %v202
    %vm353 = vcmp.eq.s32.totalorder %v139, %v206
    %vm354 = vcmp.eq.s32.totalorder %v139, %v210
    %vm355 = vcmp.eq.s32.totalorder %v140, %v150
    %vm356 = vcmp.eq.s32.totalorder %v140, %v154
    %vm357 = vcmp.eq.s32.totalorder %v140, %v158
    %vm358 = vcmp.eq.s32.totalorder %v140, %v162
    %vm359 = vcmp.eq.s32.totalorder %v140, %v166
    %vm360 = vcmp.eq.s32.totalorder %v140, %v170
    %vm361 = vcmp.eq.s32.totalorder %v140, %v174
    %vm362 = vcmp.eq.s32.totalorder %v140, %v178
    %vm363 = vcmp.eq.s32.totalorder %v140, %v182
    %vm364 = vcmp.eq.s32.totalorder %v140, %v186
    %vm365 = vcmp.eq.s32.totalorder %v140, %v190
    %vm366 = vcmp.eq.s32.totalorder %v140, %v194
    %vm367 = vcmp.eq.s32.totalorder %v140, %v198
    %vm368 = vcmp.eq.s32.totalorder %v140, %v202
    %vm369 = vcmp.eq.s32.totalorder %v140, %v206
    %vm370 = vcmp.eq.s32.totalorder %v140, %v210
    %vm371 = vcmp.eq.s32.totalorder %v141, %v150
    %vm372 = vcmp.eq.s32.totalorder %v141, %v154
    %vm373 = vcmp.eq.s32.totalorder %v141, %v158
    %vm374 = vcmp.eq.s32.totalorder %v141, %v162
    %vm375 = vcmp.eq.s32.totalorder %v141, %v166
    %vm376 = vcmp.eq.s32.totalorder %v141, %v170
    %vm377 = vcmp.eq.s32.totalorder %v141, %v174
    %vm378 = vcmp.eq.s32.totalorder %v141, %v178
    %vm379 = vcmp.eq.s32.totalorder %v141, %v182
    %vm380 = vcmp.eq.s32.totalorder %v141, %v186
    %vm381 = vcmp.eq.s32.totalorder %v141, %v190
    %vm382 = vcmp.eq.s32.totalorder %v141, %v194
    %vm383 = vcmp.eq.s32.totalorder %v141, %v198
    %vm384 = vcmp.eq.s32.totalorder %v141, %v202
    %vm385 = vcmp.eq.s32.totalorder %v141, %v206
    %vm386 = vcmp.eq.s32.totalorder %v141, %v210
    %vm387 = vcmp.eq.s32.totalorder %v142, %v150
    %vm388 = vcmp.eq.s32.totalorder %v142, %v154
    %vm389 = vcmp.eq.s32.totalorder %v142, %v158
    %vm390 = vcmp.eq.s32.totalorder %v142, %v162
    %vm391 = vcmp.eq.s32.totalorder %v142, %v166
    %vm392 = vcmp.eq.s32.totalorder %v142, %v170
    %vm393 = vcmp.eq.s32.totalorder %v142, %v174
    %vm394 = vcmp.eq.s32.totalorder %v142, %v178
    %vm395 = vcmp.eq.s32.totalorder %v142, %v182
    %vm396 = vcmp.eq.s32.totalorder %v142, %v186
    %vm397 = vcmp.eq.s32.totalorder %v142, %v190
    %vm398 = vcmp.eq.s32.totalorder %v142, %v194
    %vm399 = vcmp.eq.s32.totalorder %v142, %v198
    %vm400 = vcmp.eq.s32.totalorder %v142, %v202
    %vm401 = vcmp.eq.s32.totalorder %v142, %v206
    %vm402 = vcmp.eq.s32.totalorder %v142, %v210
    %vm403 = vcmp.eq.s32.totalorder %v143, %v150
    %vm404 = vcmp.eq.s32.totalorder %v143, %v154
    %vm405 = vcmp.eq.s32.totalorder %v143, %v158
    %vm406 = vcmp.eq.s32.totalorder %v143, %v162
    %vm407 = vcmp.eq.s32.totalorder %v143, %v166
    %vm408 = vcmp.eq.s32.totalorder %v143, %v170
    %vm409 = vcmp.eq.s32.totalorder %v143, %v174
    %vm410 = vcmp.eq.s32.totalorder %v143, %v178
    %vm411 = vcmp.eq.s32.totalorder %v143, %v182
    %vm412 = vcmp.eq.s32.totalorder %v143, %v186
    %vm413 = vcmp.eq.s32.totalorder %v143, %v190
    %vm414 = vcmp.eq.s32.totalorder %v143, %v194
    %vm415 = vcmp.eq.s32.totalorder %v143, %v198
    %vm416 = vcmp.eq.s32.totalorder %v143, %v202
    %vm417 = vcmp.eq.s32.totalorder %v143, %v206
    %vm418 = vcmp.eq.s32.totalorder %v143, %v210
    %vm419 = vcmp.eq.s32.totalorder %v144, %v150
    %vm420 = vcmp.eq.s32.totalorder %v144, %v154
    %vm421 = vcmp.eq.s32.totalorder %v144, %v158
    %vm422 = vcmp.eq.s32.totalorder %v144, %v162
    %vm423 = vcmp.eq.s32.totalorder %v144, %v166
    %vm424 = vcmp.eq.s32.totalorder %v144, %v170
    %vm425 = vcmp.eq.s32.totalorder %v144, %v174
    %vm426 = vcmp.eq.s32.totalorder %v144, %v178
    %vm427 = vcmp.eq.s32.totalorder %v144, %v182
    %vm428 = vcmp.eq.s32.totalorder %v144, %v186
    %vm429 = vcmp.eq.s32.totalorder %v144, %v190
    %vm430 = vcmp.eq.s32.totalorder %v144, %v194
    %vm431 = vcmp.eq.s32.totalorder %v144, %v198
    %vm432 = vcmp.eq.s32.totalorder %v144, %v202
    %vm433 = vcmp.eq.s32.totalorder %v144, %v206
    %vm434 = vcmp.eq.s32.totalorder %v144, %v210
    %vm435 = vcmp.eq.s32.totalorder %v145, %v150
    %vm436 = vcmp.eq.s32.totalorder %v145, %v154
    %vm437 = vcmp.eq.s32.totalorder %v145, %v158
    %vm438 = vcmp.eq.s32.totalorder %v145, %v162
    %vm439 = vcmp.eq.s32.totalorder %v145, %v166
    %vm440 = vcmp.eq.s32.totalorder %v145, %v170
    %vm441 = vcmp.eq.s32.totalorder %v145, %v174
    %vm442 = vcmp.eq.s32.totalorder %v145, %v178
    %vm443 = vcmp.eq.s32.totalorder %v145, %v182
    %vm444 = vcmp.eq.s32.totalorder %v145, %v186
    %vm445 = vcmp.eq.s32.totalorder %v145, %v190
    %vm446 = vcmp.eq.s32.totalorder %v145, %v194
    %vm447 = vcmp.eq.s32.totalorder %v145, %v198
    %vm448 = vcmp.eq.s32.totalorder %v145, %v202
    %vm449 = vcmp.eq.s32.totalorder %v145, %v206
    %vm450 = vcmp.eq.s32.totalorder %v145, %v210
    %vm451 = vcmp.eq.s32.totalorder %v146, %v150
    %vm452 = vcmp.eq.s32.totalorder %v146, %v154
    %vm453 = vcmp.eq.s32.totalorder %v146, %v158
    %vm454 = vcmp.eq.s32.totalorder %v146, %v162
    %vm455 = vcmp.eq.s32.totalorder %v146, %v166
    %vm456 = vcmp.eq.s32.totalorder %v146, %v170
    %vm457 = vcmp.eq.s32.totalorder %v146, %v174
    %vm458 = vcmp.eq.s32.totalorder %v146, %v178
    %vm459 = vcmp.eq.s32.totalorder %v146, %v182
    %vm460 = vcmp.eq.s32.totalorder %v146, %v186
    %vm461 = vcmp.eq.s32.totalorder %v146, %v190
    %vm462 = vcmp.eq.s32.totalorder %v146, %v194
    %vm463 = vcmp.eq.s32.totalorder %v146, %v198
    %vm464 = vcmp.eq.s32.totalorder %v146, %v202
    %vm465 = vcmp.eq.s32.totalorder %v146, %v206
    %vm466 = vcmp.eq.s32.totalorder %v146, %v210
    %v467 = vsel %vm211, 1, 0
    %v468 = vsel %vm212, 1, 0
    %v469 = vsel %vm213, 1, 0
    %v470 = vsel %vm214, 1, 0
    %v471 = vsel %vm215, 1, 0
    %v472 = vsel %vm216, 1, 0
    %v473 = vsel %vm217, 1, 0
    %v474 = vsel %vm218, 1, 0
    %v475 = vsel %vm219, 1, 0
    %v476 = vsel %vm220, 1, 0
    %v477 = vsel %vm221, 1, 0
    %v478 = vsel %vm222, 1, 0
    %v479 = vsel %vm223, 1, 0
    %v480 = vsel %vm224, 1, 0
    %v481 = vsel %vm225, 1, 0
    %v482 = vsel %vm226, 1, 0
    %v483 = vsel %vm227, 1, 0
    %v484 = vsel %vm228, 1, 0
    %v485 = vsel %vm229, 1, 0
    %v486 = vsel %vm230, 1, 0
    %v487 = vsel %vm231, 1, 0
    %v488 = vsel %vm232, 1, 0
    %v489 = vsel %vm233, 1, 0
    %v490 = vsel %vm234, 1, 0
    %v491 = vsel %vm235, 1, 0
    %v492 = vsel %vm236, 1, 0
    %v493 = vsel %vm237, 1, 0
    %v494 = vsel %vm238, 1, 0
    %v495 = vsel %vm239, 1, 0
    %v496 = vsel %vm240, 1, 0
    %v497 = vsel %vm241, 1, 0
    %v498 = vsel %vm242, 1, 0
    %v499 = vsel %vm243, 1, 0
    %v500 = vsel %vm244, 1, 0
    %v501 = vsel %vm245, 1, 0
    %v502 = vsel %vm246, 1, 0
    %v503 = vsel %vm247, 1, 0
    %v504 = vsel %vm248, 1, 0
    %v505 = vsel %vm249, 1, 0
    %v506 = vsel %vm250, 1, 0
    %v507 = vsel %vm251, 1, 0
    %v508 = vsel %vm252, 1, 0
    %v509 = vsel %vm253, 1, 0
    %v510 = vsel %vm254, 1, 0
    %v511 = vsel %vm255, 1, 0
    %v512 = vsel %vm256, 1, 0
    %v513 = vsel %vm257, 1, 0
    %v514 = vsel %vm258, 1, 0
    %v515 = vsel %vm259, 1, 0
    %v516 = vsel %vm260, 1, 0
    %v517 = vsel %vm261, 1, 0
    %v518 = vsel %vm262, 1, 0
    %v519 = vsel %vm263, 1, 0
    %v520 = vsel %vm264, 1, 0
    %v521 = vsel %vm265, 1, 0
    %v522 = vsel %vm266, 1, 0
    %v523 = vsel %vm267, 1, 0
    %v524 = vsel %vm268, 1, 0
    %v525 = vsel %vm269, 1, 0
    %v526 = vsel %vm270, 1, 0
    %v527 = vsel %vm271, 1, 0
    %v528 = vsel %vm272, 1, 0
    %v529 = vsel %vm273, 1, 0
    %v530 = vsel %vm274, 1, 0
    %v531 = vsel %vm275, 1, 0
    %v532 = vsel %vm276, 1, 0
    %v533 = vsel %vm277, 1, 0
    %v534 = vsel %vm278, 1, 0
    %v535 = vsel %vm279, 1, 0
    %v536 = vsel %vm280, 1, 0
    %v537 = vsel %vm281, 1, 0
    %v538 = vsel %vm282, 1, 0
    %v539 = vsel %vm283, 1, 0
    %v540 = vsel %vm284, 1, 0
    %v541 = vsel %vm285, 1, 0
    %v542 = vsel %vm286, 1, 0
    %v543 = vsel %vm287, 1, 0
    %v544 = vsel %vm288, 1, 0
    %v545 = vsel %vm289, 1, 0
    %v546 = vsel %vm290, 1, 0
    %v547 = vsel %vm291, 1, 0
    %v548 = vsel %vm292, 1, 0
    %v549 = vsel %vm293, 1, 0
    %v550 = vsel %vm294, 1, 0
    %v551 = vsel %vm295, 1, 0
    %v552 = vsel %vm296, 1, 0
    %v553 = vsel %vm297, 1, 0
    %v554 = vsel %vm298, 1, 0
    %v555 = vsel %vm299, 1, 0
    %v556 = vsel %vm300, 1, 0
    %v557 = vsel %vm301, 1, 0
    %v558 = vsel %vm302, 1, 0
    %v559 = vsel %vm303, 1, 0
    %v560 = vsel %vm304, 1, 0
    %v561 = vsel %vm305, 1, 0
    %v562 = vsel %vm306, 1, 0
    %v563 = vsel %vm307, 1, 0
    %v564 = vsel %vm308, 1, 0
    %v565 = vsel %vm309, 1, 0
    %v566 = vsel %vm310, 1, 0
    %v567 = vsel %vm311, 1, 0
    %v568 = vsel %vm312, 1, 0
    %v569 = vsel %vm313, 1, 0
    %v570 = vsel %vm314, 1, 0
    %v571 = vsel %vm315, 1, 0
    %v572 = vsel %vm316, 1, 0
    %v573 = vsel %vm317, 1, 0
    %v574 = vsel %vm318, 1, 0
    %v575 = vsel %vm319, 1, 0
    %v576 = vsel %vm320, 1, 0
    %v577 = vsel %vm321, 1, 0
    %v578 = vsel %vm322, 1, 0
    %v579 = vsel %vm323, 1, 0
    %v580 = vsel %vm324, 1, 0
    %v581 = vsel %vm325, 1, 0
    %v582 = vsel %vm326, 1, 0
    %v583 = vsel %vm327, 1, 0
    %v584 = vsel %vm328, 1, 0
    %v585 = vsel %vm329, 1, 0
    %v586 = vsel %vm330, 1, 0
    %v587 = vsel %vm331, 1, 0
    %v588 = vsel %vm332, 1, 0
    %v589 = vsel %vm333, 1, 0
    %v590 = vsel %vm334, 1, 0
    %v591 = vsel %vm335, 1, 0
    %v592 = vsel %vm336, 1, 0
    %v593 = vsel %vm337, 1, 0
    %v594 = vsel %vm338, 1, 0
    %v595 = vsel %vm339, 1, 0
    %v596 = vsel %vm340, 1, 0
    %v597 = vsel %vm341, 1, 0
    %v598 = vsel %vm342, 1, 0
    %v599 = vsel %vm343, 1, 0
    %v600 = vsel %vm344, 1, 0
    %v601 = vsel %vm345, 1, 0
    %v602 = vsel %vm346, 1, 0
    %v603 = vsel %vm347, 1, 0
    %v604 = vsel %vm348, 1, 0
    %v605 = vsel %vm349, 1, 0
    %v606 = vsel %vm350, 1, 0
    %v607 = vsel %vm351, 1, 0
    %v608 = vsel %vm352, 1, 0
    %v609 = vsel %vm353, 1, 0
    %v610 = vsel %vm354, 1, 0
    %v611 = vsel %vm355, 1, 0
    %v612 = vsel %vm356, 1, 0
    %v613 = vsel %vm357, 1, 0
    %v614 = vsel %vm358, 1, 0
    %v615 = vsel %vm359, 1, 0
    %v616 = vsel %vm360, 1, 0
    %v617 = vsel %vm361, 1, 0
    %v618 = vsel %vm362, 1, 0
    %v619 = vsel %vm363, 1, 0
    %v620 = vsel %vm364, 1, 0
    %v621 = vsel %vm365, 1, 0
    %v622 = vsel %vm366, 1, 0
    %v623 = vsel %vm367, 1, 0
    %v624 = vsel %vm368, 1, 0
    %v625 = vsel %vm369, 1, 0
    %v626 = vsel %vm370, 1, 0
    %v627 = vsel %vm371, 1, 0
    %v628 = vsel %vm372, 1, 0
    %v629 = vsel %vm373, 1, 0
    %v630 = vsel %vm374, 1, 0
    %v631 = vsel %vm375, 1, 0
    %v632 = vsel %vm376, 1, 0
    %v633 = vsel %vm377, 1, 0
    %v634 = vsel %vm378, 1, 0
    %v635 = vsel %vm379, 1, 0
    %v636 = vsel %vm380, 1, 0
    %v637 = vsel %vm381, 1, 0
    %v638 = vsel %vm382, 1, 0
    %v639 = vsel %vm383, 1, 0
    %v640 = vsel %vm384, 1, 0
    %v641 = vsel %vm385, 1, 0
    %v642 = vsel %vm386, 1, 0
    %v643 = vsel %vm387, 1, 0
    %v644 = vsel %vm388, 1, 0
    %v645 = vsel %vm389, 1, 0
    %v646 = vsel %vm390, 1, 0
    %v647 = vsel %vm391, 1, 0
    %v648 = vsel %vm392, 1, 0
    %v649 = vsel %vm393, 1, 0
    %v650 = vsel %vm394, 1, 0
    %v651 = vsel %vm395, 1, 0
    %v652 = vsel %vm396, 1, 0
    %v653 = vsel %vm397, 1, 0
    %v654 = vsel %vm398, 1, 0
    %v655 = vsel %vm399, 1, 0
    %v656 = vsel %vm400, 1, 0
    %v657 = vsel %vm401, 1, 0
    %v658 = vsel %vm402, 1, 0
    %v659 = vsel %vm403, 1, 0
    %v660 = vsel %vm404, 1, 0
    %v661 = vsel %vm405, 1, 0
    %v662 = vsel %vm406, 1, 0
    %v663 = vsel %vm407, 1, 0
    %v664 = vsel %vm408, 1, 0
    %v665 = vsel %vm409, 1, 0
    %v666 = vsel %vm410, 1, 0
    %v667 = vsel %vm411, 1, 0
    %v668 = vsel %vm412, 1, 0
    %v669 = vsel %vm413, 1, 0
    %v670 = vsel %vm414, 1, 0
    %v671 = vsel %vm415, 1, 0
    %v672 = vsel %vm416, 1, 0
    %v673 = vsel %vm417, 1, 0
    %v674 = vsel %vm418, 1, 0
    %v675 = vsel %vm419, 1, 0
    %v676 = vsel %vm420, 1, 0
    %v677 = vsel %vm421, 1, 0
    %v678 = vsel %vm422, 1, 0
    %v679 = vsel %vm423, 1, 0
    %v680 = vsel %vm424, 1, 0
    %v681 = vsel %vm425, 1, 0
    %v682 = vsel %vm426, 1, 0
    %v683 = vsel %vm427, 1, 0
    %v684 = vsel %vm428, 1, 0
    %v685 = vsel %vm429, 1, 0
    %v686 = vsel %vm430, 1, 0
    %v687 = vsel %vm431, 1, 0
    %v688 = vsel %vm432, 1, 0
    %v689 = vsel %vm433, 1, 0
    %v690 = vsel %vm434, 1, 0
    %v691 = vsel %vm435, 1, 0
    %v692 = vsel %vm436, 1, 0
    %v693 = vsel %vm437, 1, 0
    %v694 = vsel %vm438, 1, 0
    %v695 = vsel %vm439, 1, 0
    %v696 = vsel %vm440, 1, 0
    %v697 = vsel %vm441, 1, 0
    %v698 = vsel %vm442, 1, 0
    %v699 = vsel %vm443, 1, 0
    %v700 = vsel %vm444, 1, 0
    %v701 = vsel %vm445, 1, 0
    %v702 = vsel %vm446, 1, 0
    %v703 = vsel %vm447, 1, 0
    %v704 = vsel %vm448, 1, 0
    %v705 = vsel %vm449, 1, 0
    %v706 = vsel %vm450, 1, 0
    %v707 = vsel %vm451, 1, 0
    %v708 = vsel %vm452, 1, 0
    %v709 = vsel %vm453, 1, 0
    %v710 = vsel %vm454, 1, 0
    %v711 = vsel %vm455, 1, 0
    %v712 = vsel %vm456, 1, 0
    %v713 = vsel %vm457, 1, 0
    %v714 = vsel %vm458, 1, 0
    %v715 = vsel %vm459, 1, 0
    %v716 = vsel %vm460, 1, 0
    %v717 = vsel %vm461, 1, 0
    %v718 = vsel %vm462, 1, 0
    %v719 = vsel %vm463, 1, 0
    %v720 = vsel %vm464, 1, 0
    %v721 = vsel %vm465, 1, 0
    %v722 = vsel %vm466, 1, 0
    %v723 = vcvt.s32.f32 %v467
    %v724 = vcvt.s32.f32 %v468
    %v725 = vcvt.s32.f32 %v469
    %v726 = vcvt.s32.f32 %v470
    %v727 = vcvt.s32.f32 %v471
    %v728 = vcvt.s32.f32 %v472
    %v729 = vcvt.s32.f32 %v473
    %v730 = vcvt.s32.f32 %v474
    %v731 = vcvt.s32.f32 %v475
    %v732 = vcvt.s32.f32 %v476
    %v733 = vcvt.s32.f32 %v477
    %v734 = vcvt.s32.f32 %v478
    %v735 = vcvt.s32.f32 %v479
    %v736 = vcvt.s32.f32 %v480
    %v737 = vcvt.s32.f32 %v481
    %v738 = vcvt.s32.f32 %v482
    %v739 = vcvt.s32.f32 %v483
    %v740 = vcvt.s32.f32 %v484
    %v741 = vcvt.s32.f32 %v485
    %v742 = vcvt.s32.f32 %v486
    %v743 = vcvt.s32.f32 %v487
    %v744 = vcvt.s32.f32 %v488
    %v745 = vcvt.s32.f32 %v489
    %v746 = vcvt.s32.f32 %v490
    %v747 = vcvt.s32.f32 %v491
    %v748 = vcvt.s32.f32 %v492
    %v749 = vcvt.s32.f32 %v493
    %v750 = vcvt.s32.f32 %v494
    %v751 = vcvt.s32.f32 %v495
    %v752 = vcvt.s32.f32 %v496
    %v753 = vcvt.s32.f32 %v497
    %v754 = vcvt.s32.f32 %v498
    %v755 = vcvt.s32.f32 %v499
    %v756 = vcvt.s32.f32 %v500
    %v757 = vcvt.s32.f32 %v501
    %v758 = vcvt.s32.f32 %v502
    %v759 = vcvt.s32.f32 %v503
    %v760 = vcvt.s32.f32 %v504
    %v761 = vcvt.s32.f32 %v505
    %v762 = vcvt.s32.f32 %v506
    %v763 = vcvt.s32.f32 %v507
    %v764 = vcvt.s32.f32 %v508
    %v765 = vcvt.s32.f32 %v509
    %v766 = vcvt.s32.f32 %v510
    %v767 = vcvt.s32.f32 %v511
    %v768 = vcvt.s32.f32 %v512
    %v769 = vcvt.s32.f32 %v513
    %v770 = vcvt.s32.f32 %v514
    %v771 = vcvt.s32.f32 %v515
    %v772 = vcvt.s32.f32 %v516
    %v773 = vcvt.s32.f32 %v517
    %v774 = vcvt.s32.f32 %v518
    %v775 = vcvt.s32.f32 %v519
    %v776 = vcvt.s32.f32 %v520
    %v777 = vcvt.s32.f32 %v521
    %v778 = vcvt.s32.f32 %v522
    %v779 = vcvt.s32.f32 %v523
    %v780 = vcvt.s32.f32 %v524
    %v781 = vcvt.s32.f32 %v525
    %v782 = vcvt.s32.f32 %v526
    %v783 = vcvt.s32.f32 %v527
    %v784 = vcvt.s32.f32 %v528
    %v785 = vcvt.s32.f32 %v529
    %v786 = vcvt.s32.f32 %v530
    %v787 = vcvt.s32.f32 %v531
    %v788 = vcvt.s32.f32 %v532
    %v789 = vcvt.s32.f32 %v533
    %v790 = vcvt.s32.f32 %v534
    %v791 = vcvt.s32.f32 %v535
    %v792 = vcvt.s32.f32 %v536
    %v793 = vcvt.s32.f32 %v537
    %v794 = vcvt.s32.f32 %v538
    %v795 = vcvt.s32.f32 %v539
    %v796 = vcvt.s32.f32 %v540
    %v797 = vcvt.s32.f32 %v541
    %v798 = vcvt.s32.f32 %v542
    %v799 = vcvt.s32.f32 %v543
    %v800 = vcvt.s32.f32 %v544
    %v801 = vcvt.s32.f32 %v545
    %v802 = vcvt.s32.f32 %v546
    %v803 = vcvt.s32.f32 %v547
    %v804 = vcvt.s32.f32 %v548
    %v805 = vcvt.s32.f32 %v549
    %v806 = vcvt.s32.f32 %v550
    %v807 = vcvt.s32.f32 %v551
    %v808 = vcvt.s32.f32 %v552
    %v809 = vcvt.s32.f32 %v553
    %v810 = vcvt.s32.f32 %v554
    %v811 = vcvt.s32.f32 %v555
    %v812 = vcvt.s32.f32 %v556
    %v813 = vcvt.s32.f32 %v557
    %v814 = vcvt.s32.f32 %v558
    %v815 = vcvt.s32.f32 %v559
    %v816 = vcvt.s32.f32 %v560
    %v817 = vcvt.s32.f32 %v561
    %v818 = vcvt.s32.f32 %v562
    %v819 = vcvt.s32.f32 %v563
    %v820 = vcvt.s32.f32 %v564
    %v821 = vcvt.s32.f32 %v565
    %v822 = vcvt.s32.f32 %v566
    %v823 = vcvt.s32.f32 %v567
    %v824 = vcvt.s32.f32 %v568
    %v825 = vcvt.s32.f32 %v569
    %v826 = vcvt.s32.f32 %v570
    %v827 = vcvt.s32.f32 %v571
    %v828 = vcvt.s32.f32 %v572
    %v829 = vcvt.s32.f32 %v573
    %v830 = vcvt.s32.f32 %v574
    %v831 = vcvt.s32.f32 %v575
    %v832 = vcvt.s32.f32 %v576
    %v833 = vcvt.s32.f32 %v577
    %v834 = vcvt.s32.f32 %v578
    %v835 = vcvt.s32.f32 %v579
    %v836 = vcvt.s32.f32 %v580
    %v837 = vcvt.s32.f32 %v581
    %v838 = vcvt.s32.f32 %v582
    %v839 = vcvt.s32.f32 %v583
    %v840 = vcvt.s32.f32 %v584
    %v841 = vcvt.s32.f32 %v585
    %v842 = vcvt.s32.f32 %v586
    %v843 = vcvt.s32.f32 %v587
    %v844 = vcvt.s32.f32 %v588
    %v845 = vcvt.s32.f32 %v589
    %v846 = vcvt.s32.f32 %v590
    %v847 = vcvt.s32.f32 %v591
    %v848 = vcvt.s32.f32 %v592
    %v849 = vcvt.s32.f32 %v593
    %v850 = vcvt.s32.f32 %v594
    %v851 = vcvt.s32.f32 %v595
    %v852 = vcvt.s32.f32 %v596
    %v853 = vcvt.s32.f32 %v597
    %v854 = vcvt.s32.f32 %v598
    %v855 = vcvt.s32.f32 %v599
    %v856 = vcvt.s32.f32 %v600
    %v857 = vcvt.s32.f32 %v601
    %v858 = vcvt.s32.f32 %v602
    %v859 = vcvt.s32.f32 %v603
    %v860 = vcvt.s32.f32 %v604
    %v861 = vcvt.s32.f32 %v605
    %v862 = vcvt.s32.f32 %v606
    %v863 = vcvt.s32.f32 %v607
    %v864 = vcvt.s32.f32 %v608
    %v865 = vcvt.s32.f32 %v609
    %v866 = vcvt.s32.f32 %v610
    %v867 = vcvt.s32.f32 %v611
    %v868 = vcvt.s32.f32 %v612
    %v869 = vcvt.s32.f32 %v613
    %v870 = vcvt.s32.f32 %v614
    %v871 = vcvt.s32.f32 %v615
    %v872 = vcvt.s32.f32 %v616
    %v873 = vcvt.s32.f32 %v617
    %v874 = vcvt.s32.f32 %v618
    %v875 = vcvt.s32.f32 %v619
    %v876 = vcvt.s32.f32 %v620
    %v877 = vcvt.s32.f32 %v621
    %v878 = vcvt.s32.f32 %v622
    %v879 = vcvt.s32.f32 %v623
    %v880 = vcvt.s32.f32 %v624
    %v881 = vcvt.s32.f32 %v625
    %v882 = vcvt.s32.f32 %v626
    %v883 = vcvt.s32.f32 %v627
    %v884 = vcvt.s32.f32 %v628
    %v885 = vcvt.s32.f32 %v629
    %v886 = vcvt.s32.f32 %v630
    %v887 = vcvt.s32.f32 %v631
    %v888 = vcvt.s32.f32 %v632
    %v889 = vcvt.s32.f32 %v633
    %v890 = vcvt.s32.f32 %v634
    %v891 = vcvt.s32.f32 %v635
    %v892 = vcvt.s32.f32 %v636
    %v893 = vcvt.s32.f32 %v637
    %v894 = vcvt.s32.f32 %v638
    %v895 = vcvt.s32.f32 %v639
    %v896 = vcvt.s32.f32 %v640
    %v897 = vcvt.s32.f32 %v641
    %v898 = vcvt.s32.f32 %v642
    %v899 = vcvt.s32.f32 %v643
    %v900 = vcvt.s32.f32 %v644
    %v901 = vcvt.s32.f32 %v645
    %v902 = vcvt.s32.f32 %v646
    %v903 = vcvt.s32.f32 %v647
    %v904 = vcvt.s32.f32 %v648
    %v905 = vcvt.s32.f32 %v649
    %v906 = vcvt.s32.f32 %v650
    %v907 = vcvt.s32.f32 %v651
    %v908 = vcvt.s32.f32 %v652
    %v909 = vcvt.s32.f32 %v653
    %v910 = vcvt.s32.f32 %v654
    %v911 = vcvt.s32.f32 %v655
    %v912 = vcvt.s32.f32 %v656
    %v913 = vcvt.s32.f32 %v657
    %v914 = vcvt.s32.f32 %v658
    %v915 = vcvt.s32.f32 %v659
    %v916 = vcvt.s32.f32 %v660
    %v917 = vcvt.s32.f32 %v661
    %v918 = vcvt.s32.f32 %v662
    %v919 = vcvt.s32.f32 %v663
    %v920 = vcvt.s32.f32 %v664
    %v921 = vcvt.s32.f32 %v665
    %v922 = vcvt.s32.f32 %v666
    %v923 = vcvt.s32.f32 %v667
    %v924 = vcvt.s32.f32 %v668
    %v925 = vcvt.s32.f32 %v669
    %v926 = vcvt.s32.f32 %v670
    %v927 = vcvt.s32.f32 %v671
    %v928 = vcvt.s32.f32 %v672
    %v929 = vcvt.s32.f32 %v673
    %v930 = vcvt.s32.f32 %v674
    %v931 = vcvt.s32.f32 %v675
    %v932 = vcvt.s32.f32 %v676
    %v933 = vcvt.s32.f32 %v677
    %v934 = vcvt.s32.f32 %v678
    %v935 = vcvt.s32.f32 %v679
    %v936 = vcvt.s32.f32 %v680
    %v937 = vcvt.s32.f32 %v681
    %v938 = vcvt.s32.f32 %v682
    %v939 = vcvt.s32.f32 %v683
    %v940 = vcvt.s32.f32 %v684
    %v941 = vcvt.s32.f32 %v685
    %v942 = vcvt.s32.f32 %v686
    %v943 = vcvt.s32.f32 %v687
    %v944 = vcvt.s32.f32 %v688
    %v945 = vcvt.s32.f32 %v689
    %v946 = vcvt.s32.f32 %v690
    %v947 = vcvt.s32.f32 %v691
    %v948 = vcvt.s32.f32 %v692
    %v949 = vcvt.s32.f32 %v693
    %v950 = vcvt.s32.f32 %v694
    %v951 = vcvt.s32.f32 %v695
    %v952 = vcvt.s32.f32 %v696
    %v953 = vcvt.s32.f32 %v697
    %v954 = vcvt.s32.f32 %v698
    %v955 = vcvt.s32.f32 %v699
    %v956 = vcvt.s32.f32 %v700
    %v957 = vcvt.s32.f32 %v701
    %v958 = vcvt.s32.f32 %v702
    %v959 = vcvt.s32.f32 %v703
    %v960 = vcvt.s32.f32 %v704
    %v961 = vcvt.s32.f32 %v705
    %v962 = vcvt.s32.f32 %v706
    %v963 = vcvt.s32.f32 %v707
    %v964 = vcvt.s32.f32 %v708
    %v965 = vcvt.s32.f32 %v709
    %v966 = vcvt.s32.f32 %v710
    %v967 = vcvt.s32.f32 %v711
    %v968 = vcvt.s32.f32 %v712
    %v969 = vcvt.s32.f32 %v713
    %v970 = vcvt.s32.f32 %v714
    %v971 = vcvt.s32.f32 %v715
    %v972 = vcvt.s32.f32 %v716
    %v973 = vcvt.s32.f32 %v717
    %v974 = vcvt.s32.f32 %v718
    %v975 = vcvt.s32.f32 %v719
    %v976 = vcvt.s32.f32 %v720
    %v977 = vcvt.s32.f32 %v721
    %v978 = vcvt.s32.f32 %v722
    %v979 = vld [vmem:[#allocation2] sm:$0xff]
    %v980 = vld [vmem:[#allocation2 + $0x8] sm:$0xff]
    %v981 = vld [vmem:[#allocation2 + $0x10] sm:$0xff]
    %v982 = vld [vmem:[#allocation2 + $0x18] sm:$0xff]
    %v983 = vld [vmem:[#allocation2 + $0x20] sm:$0xff]
    %v984 = vld [vmem:[#allocation2 + $0x28] sm:$0xff]
    %v985 = vld [vmem:[#allocation2 + $0x30] sm:$0xff]
    %v986 = vld [vmem:[#allocation2 + $0x38] sm:$0xff]
    %v987 = vld [vmem:[#allocation2 + $0x40] sm:$0xff]
    %v988 = vld [vmem:[#allocation2 + $0x48] sm:$0xff]
    %v989 = vld [vmem:[#allocation2 + $0x50] sm:$0xff]
    %v990 = vld [vmem:[#allocation2 + $0x58] sm:$0xff]
    %v991 = vld [vmem:[#allocation2 + $0x60] sm:$0xff]
    %v992 = vld [vmem:[#allocation2 + $0x68] sm:$0xff]
    %v993 = vld [vmem:[#allocation2 + $0x70] sm:$0xff]
    %v994 = vld [vmem:[#allocation2 + $0x78] sm:$0xff]
    %v995 = vld [vmem:[#allocation2 + $0x80] sm:$0xff]
    %v996 = vld [vmem:[#allocation2 + $0x88] sm:$0xff]
    %v997 = vld [vmem:[#allocation2 + $0x90] sm:$0xff]
    %v998 = vld [vmem:[#allocation2 + $0x98] sm:$0xff]
    %v999 = vld [vmem:[#allocation2 + $0xa0] sm:$0xff]
    %v1000 = vld [vmem:[#allocation2 + $0xa8] sm:$0xff]
    %v1001 = vld [vmem:[#allocation2 + $0xb0] sm:$0xff]
    %v1002 = vld [vmem:[#allocation2 + $0xb8] sm:$0xff]
    %v1003 = vld [vmem:[#allocation2 + $0xc0] sm:$0xff]
    %v1004 = vld [vmem:[#allocation2 + $0xc8] sm:$0xff]
    %v1005 = vld [vmem:[#allocation2 + $0xd0] sm:$0xff]
    %v1006 = vld [vmem:[#allocation2 + $0xd8] sm:$0xff]
    %v1007 = vld [vmem:[#allocation2 + $0xe0] sm:$0xff]
    %v1008 = vld [vmem:[#allocation2 + $0xe8] sm:$0xff]
    %v1009 = vld [vmem:[#allocation2 + $0xf0] sm:$0xff]
    %v1010 = vld [vmem:[#allocation2 + $0xf8] sm:$0xff]
    %v1011 = vld [vmem:[#allocation2 + $0x100] sm:$0xff]
    %v1012 = vld [vmem:[#allocation2 + $0x108] sm:$0xff]
    %v1013 = vld [vmem:[#allocation2 + $0x110] sm:$0xff]
    %v1014 = vld [vmem:[#allocation2 + $0x118] sm:$0xff]
    %v1015 = vld [vmem:[#allocation2 + $0x120] sm:$0xff]
    %v1016 = vld [vmem:[#allocation2 + $0x128] sm:$0xff]
    %v1017 = vld [vmem:[#allocation2 + $0x130] sm:$0xff]
    %v1018 = vld [vmem:[#allocation2 + $0x138] sm:$0xff]
    %v1019 = vld [vmem:[#allocation2 + $0x140] sm:$0xff]
    %v1020 = vld [vmem:[#allocation2 + $0x148] sm:$0xff]
    %v1021 = vld [vmem:[#allocation2 + $0x150] sm:$0xff]
    %v1022 = vld [vmem:[#allocation2 + $0x158] sm:$0xff]
    %v1023 = vld [vmem:[#allocation2 + $0x160] sm:$0xff]
    %v1024 = vld [vmem:[#allocation2 + $0x168] sm:$0xff]
    %v1025 = vld [vmem:[#allocation2 + $0x170] sm:$0xff]
    %v1026 = vld [vmem:[#allocation2 + $0x178] sm:$0xff]
    %v1027 = vld [vmem:[#allocation2 + $0x180] sm:$0xff]
    %v1028 = vld [vmem:[#allocation2 + $0x188] sm:$0xff]
    %v1029 = vld [vmem:[#allocation2 + $0x190] sm:$0xff]
    %v1030 = vld [vmem:[#allocation2 + $0x198] sm:$0xff]
    %v1031 = vld [vmem:[#allocation2 + $0x1a0] sm:$0xff]
    %v1032 = vld [vmem:[#allocation2 + $0x1a8] sm:$0xff]
    %v1033 = vld [vmem:[#allocation2 + $0x1b0] sm:$0xff]
    %v1034 = vld [vmem:[#allocation2 + $0x1b8] sm:$0xff]
    %v1035 = vld [vmem:[#allocation2 + $0x1c0] sm:$0xff]
    %v1036 = vld [vmem:[#allocation2 + $0x1c8] sm:$0xff]
    %v1037 = vld [vmem:[#allocation2 + $0x1d0] sm:$0xff]
    %v1038 = vld [vmem:[#allocation2 + $0x1d8] sm:$0xff]
    %v1039 = vld [vmem:[#allocation2 + $0x1e0] sm:$0xff]
    %v1040 = vld [vmem:[#allocation2 + $0x1e8] sm:$0xff]
    %v1041 = vld [vmem:[#allocation2 + $0x1f0] sm:$0xff]
    %v1042 = vld [vmem:[#allocation2 + $0x1f8] sm:$0xff]
    %1043 = vmatprep.subr.mxu0 %v724
    %1044 = vmatpush1.msra.mxu0 %v723
    %1045 = vmatprep.subr.mxu0 %v740
    %1046 = vmatpush1.msra.mxu0 %v739
    %1047 = vmatprep.subr.mxu0 %v756
    %1048 = vmatpush1.msra.mxu0 %v755
    %1049 = vmatprep.subr.mxu0 %v772
    %1050 = vmatpush1.msra.mxu0 %v771
    %1051 = vmatprep.subr.mxu0 %v788
    %1052 = vmatpush1.msra.mxu0 %v787
    %1053 = vmatprep.subr.mxu0 %v804
    %1054 = vmatpush1.msra.mxu0 %v803
    %1055 = vmatprep.subr.mxu0 %v820
    %1056 = vmatpush1.msra.mxu0 %v819
    %1057 = vmatprep.subr.mxu0 %v836
    %1058 = vmatpush1.msra.mxu0 %v835
    %1059 = vmatprep.subr.mxu0 %v852
    %1060 = vmatpush1.msra.mxu0 %v851
    %1061 = vmatprep.subr.mxu0 %v868
    %1062 = vmatpush1.msra.mxu0 %v867
    %1063 = vmatprep.subr.mxu0 %v884
    %1064 = vmatpush1.msra.mxu0 %v883
    %1065 = vmatprep.subr.mxu0 %v900
    %1066 = vmatpush1.msra.mxu0 %v899
    %1067 = vmatprep.subr.mxu0 %v916
    %1068 = vmatpush1.msra.mxu0 %v915
    %1069 = vmatprep.subr.mxu0 %v932
    %1070 = vmatpush1.msra.mxu0 %v931
    %1071 = vmatprep.subr.mxu0 %v948
    %1072 = vmatpush1.msra.mxu0 %v947
    %1073 = vmatprep.subr.mxu0 %v964
    %1074 = vmatpush1.msra.mxu0 %v963
    %1075 = vmatprep.subr.mxu0 0.0
    %1076 = vmatpush1.msra.mxu0 0.0
    %1077 = vmatprep.subr.mxu0 0.0
    %1078 = vmatpush1.msra.mxu0 0.0
    %1079 = vmatprep.subr.mxu0 0.0
    %1080 = vmatpush1.msra.mxu0 0.0
    %1081 = vmatprep.subr.mxu0 0.0
    %1082 = vmatpush1.msra.mxu0 0.0
    %1083 = vmatprep.subr.mxu0 0.0
    %1084 = vmatpush1.msra.mxu0 0.0
    %1085 = vmatprep.subr.mxu0 0.0
    %1086 = vmatpush1.msra.mxu0 0.0
    %1087 = vmatprep.subr.mxu0 0.0
    %1088 = vmatpush1.msra.mxu0 0.0
    %1089 = vmatprep.subr.mxu0 0.0
    %1090 = vmatpush1.msra.mxu0 0.0
    %1091 = vmatprep.subr.mxu0 0.0
    %1092 = vmatpush1.msra.mxu0 0.0
    %1093 = vmatprep.subr.mxu0 0.0
    %1094 = vmatpush1.msra.mxu0 0.0
    %1095 = vmatprep.subr.mxu0 0.0
    %1096 = vmatpush1.msra.mxu0 0.0
    %1097 = vmatprep.subr.mxu0 0.0
    %1098 = vmatpush1.msra.mxu0 0.0
    %1099 = vmatprep.subr.mxu0 0.0
    %1100 = vmatpush1.msra.mxu0 0.0
    %1101 = vmatprep.subr.mxu0 0.0
    %1102 = vmatpush1.msra.mxu0 0.0
    %1103 = vmatprep.subr.mxu0 0.0
    %1104 = vmatpush1.msra.mxu0 0.0
    %1105 = vmatprep.subr.mxu0 0.0
    %1106 = vmatpush1.msra.mxu0 0.0
    %1107 = vmatprep.mubr.f32.mxu0 0.0
    %1108 = vmatmul.mubr.f32.gmra.mrb[0].mxu0 %v108
    %v1109 = vpop.f32.mrb[0].mxu0
    %v1110 = vadd.f32 0.0, %v1109
    %v1111 = vpop.f32.mrb[0].mxu0
    %v1112 = vadd.f32 0.0, %v1111
    %1113 = vmatprep.mubr.f32.mxu0 0.0
    %1114 = vmatmul.mubr.f32.gmra.mrb[0].mxu0 %v109
    %v1115 = vpop.f32.mrb[0].mxu0
    %v1116 = vadd.f32 0.0, %v1115
    %v1117 = vpop.f32.mrb[0].mxu0
    %v1118 = vadd.f32 0.0, %v1117
    %1119 = vmatprep.mubr.f32.mxu0 0.0
    %1120 = vmatmul.mubr.f32.gmra.mrb[0].mxu0 %v110
    %v1121 = vpop.f32.mrb[0].mxu0
    %v1122 = vadd.f32 0.0, %v1121
    %v1123 = vpop.f32.mrb[0].mxu0
    %v1124 = vadd.f32 0.0, %v1123
    %1125 = vmatprep.mubr.f32.mxu0 0.0
    %1126 = vmatmul.mubr.f32.gmra.mrb[0].mxu0 %v111
    %v1127 = vpop.f32.mrb[0].mxu0
    %v1128 = vadd.f32 0.0, %v1127
    %v1129 = vpop.f32.mrb[0].mxu0
    %v1130 = vadd.f32 0.0, %v1129
    %1131 = vdwg.mxu0
    %1132 = vmatprep.subr.mxu0 %v726
    %1133 = vmatpush1.msra.mxu0 %v725
    %1134 = vmatprep.subr.mxu0 %v742
    %1135 = vmatpush1.msra.mxu0 %v741
    %1136 = vmatprep.subr.mxu0 %v758
    %1137 = vmatpush1.msra.mxu0 %v757
    %1138 = vmatprep.subr.mxu0 %v774
    %1139 = vmatpush1.msra.mxu0 %v773
    %1140 = vmatprep.subr.mxu0 %v790
    %1141 = vmatpush1.msra.mxu0 %v789
    %1142 = vmatprep.subr.mxu0 %v806
    %1143 = vmatpush1.msra.mxu0 %v805
    %1144 = vmatprep.subr.mxu0 %v822
    %1145 = vmatpush1.msra.mxu0 %v821
    %1146 = vmatprep.subr.mxu0 %v838
    %1147 = vmatpush1.msra.mxu0 %v837
    %1148 = vmatprep.subr.mxu0 %v854
    %1149 = vmatpush1.msra.mxu0 %v853
    %1150 = vmatprep.subr.mxu0 %v870
    %1151 = vmatpush1.msra.mxu0 %v869
    %1152 = vmatprep.subr.mxu0 %v886
    %1153 = vmatpush1.msra.mxu0 %v885
    %1154 = vmatprep.subr.mxu0 %v902
    %1155 = vmatpush1.msra.mxu0 %v901
    %1156 = vmatprep.subr.mxu0 %v918
    %1157 = vmatpush1.msra.mxu0 %v917
    %1158 = vmatprep.subr.mxu0 %v934
    %1159 = vmatpush1.msra.mxu0 %v933
    %1160 = vmatprep.subr.mxu0 %v950
    %1161 = vmatpush1.msra.mxu0 %v949
    %1162 = vmatprep.subr.mxu0 %v966
    %1163 = vmatpush1.msra.mxu0 %v965
    %1164 = vmatprep.subr.mxu0 0.0
    %1165 = vmatpush1.msra.mxu0 0.0
    %1166 = vmatprep.subr.mxu0 0.0
    %1167 = vmatpush1.msra.mxu0 0.0
    %1168 = vmatprep.subr.mxu0 0.0
    %1169 = vmatpush1.msra.mxu0 0.0
    %1170 = vmatprep.subr.mxu0 0.0
    %1171 = vmatpush1.msra.mxu0 0.0
    %1172 = vmatprep.subr.mxu0 0.0
    %1173 = vmatpush1.msra.mxu0 0.0
    %1174 = vmatprep.subr.mxu0 0.0
    %1175 = vmatpush1.msra.mxu0 0.0
    %1176 = vmatprep.subr.mxu0 0.0
    %1177 = vmatpush1.msra.mxu0 0.0
    %1178 = vmatprep.subr.mxu0 0.0
    %1179 = vmatpush1.msra.mxu0 0.0
    %1180 = vmatprep.subr.mxu0 0.0
    %1181 = vmatpush1.msra.mxu0 0.0
    %1182 = vmatprep.subr.mxu0 0.0
    %1183 = vmatpush1.msra.mxu0 0.0
    %1184 = vmatprep.subr.mxu0 0.0
    %1185 = vmatpush1.msra.mxu0 0.0
    %1186 = vmatprep.subr.mxu0 0.0
    %1187 = vmatpush1.msra.mxu0 0.0
    %1188 = vmatprep.subr.mxu0 0.0
    %1189 = vmatpush1.msra.mxu0 0.0
    %1190 = vmatprep.subr.mxu0 0.0
    %1191 = vmatpush1.msra.mxu0 0.0
    %1192 = vmatprep.subr.mxu0 0.0
    %1193 = vmatpush1.msra.mxu0 0.0
    %1194 = vmatprep.subr.mxu0 0.0
    %1195 = vmatpush1.msra.mxu0 0.0
    %1196 = vmatprep.mubr.f32.mxu0 0.0
    %1197 = vmatmul.mubr.f32.gmra.mrb[0].mxu0 %v108
    %v1198 = vpop.f32.mrb[0].mxu0
    %v1199 = vadd.f32 0.0, %v1198
    %v1200 = vpop.f32.mrb[0].mxu0
    %v1201 = vadd.f32 0.0, %v1200
    %1202 = vmatprep.mubr.f32.mxu0 0.0
    %1203 = vmatmul.mubr.f32.gmra.mrb[0].mxu0 %v109
    %v1204 = vpop.f32.mrb[0].mxu0
    %v1205 = vadd.f32 0.0, %v1204
    %v1206 = vpop.f32.mrb[0].mxu0
    %v1207 = vadd.f32 0.0, %v1206
    %1208 = vmatprep.mubr.f32.mxu0 0.0
    %1209 = vmatmul.mubr.f32.gmra.mrb[0].mxu0 %v110
    %v1210 = vpop.f32.mrb[0].mxu0
    %v1211 = vadd.f32 0.0, %v1210
    %v1212 = vpop.f32.mrb[0].mxu0
    %v1213 = vadd.f32 0.0, %v1212
    %1214 = vmatprep.mubr.f32.mxu0 0.0
    %1215 = vmatmul.mubr.f32.gmra.mrb[0].mxu0 %v111
    %v1216 = vpop.f32.mrb[0].mxu0
    %v1217 = vadd.f32 0.0, %v1216
    %v1218 = vpop.f32.mrb[0].mxu0
    %v1219 = vadd.f32 0.0, %v1218
    %1220 = vdwg.mxu0
    %1221 = vmatprep.subr.mxu0 %v728
    %1222 = vmatpush1.msra.mxu0 %v727
    %1223 = vmatprep.subr.mxu0 %v744
    %1224 = vmatpush1.msra.mxu0 %v743
    %1225 = vmatprep.subr.mxu0 %v760
    %1226 = vmatpush1.msra.mxu0 %v759
    %1227 = vmatprep.subr.mxu0 %v776
    %1228 = vmatpush1.msra.mxu0 %v775
    %1229 = vmatprep.subr.mxu0 %v792
    %1230 = vmatpush1.msra.mxu0 %v791
    %1231 = vmatprep.subr.mxu0 %v808
    %1232 = vmatpush1.msra.mxu0 %v807
    %1233 = vmatprep.subr.mxu0 %v824
    %1234 = vmatpush1.msra.mxu0 %v823
    %1235 = vmatprep.subr.mxu0 %v840
    %1236 = vmatpush1.msra.mxu0 %v839
    %1237 = vmatprep.subr.mxu0 %v856
    %1238 = vmatpush1.msra.mxu0 %v855
    %1239 = vmatprep.subr.mxu0 %v872
    %1240 = vmatpush1.msra.mxu0 %v871
    %1241 = vmatprep.subr.mxu0 %v888
    %1242 = vmatpush1.msra.mxu0 %v887
    %1243 = vmatprep.subr.mxu0 %v904
    %1244 = vmatpush1.msra.mxu0 %v903
    %1245 = vmatprep.subr.mxu0 %v920
    %1246 = vmatpush1.msra.mxu0 %v919
    %1247 = vmatprep.subr.mxu0 %v936
    %1248 = vmatpush1.msra.mxu0 %v935
    %1249 = vmatprep.subr.mxu0 %v952
    %1250 = vmatpush1.msra.mxu0 %v951
    %1251 = vmatprep.subr.mxu0 %v968
    %1252 = vmatpush1.msra.mxu0 %v967
    %1253 = vmatprep.subr.mxu0 0.0
    %1254 = vmatpush1.msra.mxu0 0.0
    %1255 = vmatprep.subr.mxu0 0.0
    %1256 = vmatpush1.msra.mxu0 0.0
    %1257 = vmatprep.subr.mxu0 0.0
    %1258 = vmatpush1.msra.mxu0 0.0
    %1259 = vmatprep.subr.mxu0 0.0
    %1260 = vmatpush1.msra.mxu0 0.0
    %1261 = vmatprep.subr.mxu0 0.0
    %1262 = vmatpush1.msra.mxu0 0.0
    %1263 = vmatprep.subr.mxu0 0.0
    %1264 = vmatpush1.msra.mxu0 0.0
    %1265 = vmatprep.subr.mxu0 0.0
    %1266 = vmatpush1.msra.mxu0 0.0
    %1267 = vmatprep.subr.mxu0 0.0
    %1268 = vmatpush1.msra.mxu0 0.0
    %1269 = vmatprep.subr.mxu0 0.0
    %1270 = vmatpush1.msra.mxu0 0.0
    %1271 = vmatprep.subr.mxu0 0.0
    %1272 = vmatpush1.msra.mxu0 0.0
    %1273 = vmatprep.subr.mxu0 0.0
    %1274 = vmatpush1.msra.mxu0 0.0
    %1275 = vmatprep.subr.mxu0 0.0
    %1276 = vmatpush1.msra.mxu0 0.0
    %1277 = vmatprep.subr.mxu0 0.0
    %1278 = vmatpush1.msra.mxu0 0.0
    %1279 = vmatprep.subr.mxu0 0.0
    %1280 = vmatpush1.msra.mxu0 0.0
    %1281 = vmatprep.subr.mxu0 0.0
    %1282 = vmatpush1.msra.mxu0 0.0
    %1283 = vmatprep.subr.mxu0 0.0
    %1284 = vmatpush1.msra.mxu0 0.0
    %1285 = vmatprep.mubr.f32.mxu0 0.0
    %1286 = vmatmul.mubr.f32.gmra.mrb[0].mxu0 %v108
    %v1287 = vpop.f32.mrb[0].mxu0
    %v1288 = vadd.f32 0.0, %v1287
    %v1289 = vpop.f32.mrb[0].mxu0
    %v1290 = vadd.f32 0.0, %v1289
    %1291 = vmatprep.mubr.f32.mxu0 0.0
    %1292 = vmatmul.mubr.f32.gmra.mrb[0].mxu0 %v109
    %v1293 = vpop.f32.mrb[0].mxu0
    %v1294 = vadd.f32 0.0, %v1293
    %v1295 = vpop.f32.mrb[0].mxu0
    %v1296 = vadd.f32 0.0, %v1295
    %1297 = vmatprep.mubr.f32.mxu0 0.0
    %1298 = vmatmul.mubr.f32.gmra.mrb[0].mxu0 %v110
    %v1299 = vpop.f32.mrb[0].mxu0
    %v1300 = vadd.f32 0.0, %v1299
    %v1301 = vpop.f32.mrb[0].mxu0
    %v1302 = vadd.f32 0.0, %v1301
    %1303 = vmatprep.mubr.f32.mxu0 0.0
    %1304 = vmatmul.mubr.f32.gmra.mrb[0].mxu0 %v111
    %v1305 = vpop.f32.mrb[0].mxu0
    %v1306 = vadd.f32 0.0, %v1305
    %v1307 = vpop.f32.mrb[0].mxu0
    %v1308 = vadd.f32 0.0, %v1307
    %1309 = vdwg.mxu0
    %1310 = vmatprep.subr.mxu0 %v730
    %1311 = vmatpush1.msra.mxu0 %v729
    %1312 = vmatprep.subr.mxu0 %v746
    %1313 = vmatpush1.msra.mxu0 %v745
    %1314 = vmatprep.subr.mxu0 %v762
    %1315 = vmatpush1.msra.mxu0 %v761
    %1316 = vmatprep.subr.mxu0 %v778
    %1317 = vmatpush1.msra.mxu0 %v777
    %1318 = vmatprep.subr.mxu0 %v794
    %1319 = vmatpush1.msra.mxu0 %v793
    %1320 = vmatprep.subr.mxu0 %v810
    %1321 = vmatpush1.msra.mxu0 %v809
    %1322 = vmatprep.subr.mxu0 %v826
    %1323 = vmatpush1.msra.mxu0 %v825
    %1324 = vmatprep.subr.mxu0 %v842
    %1325 = vmatpush1.msra.mxu0 %v841
    %1326 = vmatprep.subr.mxu0 %v858
    %1327 = vmatpush1.msra.mxu0 %v857
    %1328 = vmatprep.subr.mxu0 %v874
    %1329 = vmatpush1.msra.mxu0 %v873
    %1330 = vmatprep.subr.mxu0 %v890
    %1331 = vmatpush1.msra.mxu0 %v889
    %1332 = vmatprep.subr.mxu0 %v906
    %1333 = vmatpush1.msra.mxu0 %v905
    %1334 = vmatprep.subr.mxu0 %v922
    %1335 = vmatpush1.msra.mxu0 %v921
    %1336 = vmatprep.subr.mxu0 %v938
    %1337 = vmatpush1.msra.mxu0 %v937
    %1338 = vmatprep.subr.mxu0 %v954
    %1339 = vmatpush1.msra.mxu0 %v953
    %1340 = vmatprep.subr.mxu0 %v970
    %1341 = vmatpush1.msra.mxu0 %v969
    %1342 = vmatprep.subr.mxu0 0.0
    %1343 = vmatpush1.msra.mxu0 0.0
    %1344 = vmatprep.subr.mxu0 0.0
    %1345 = vmatpush1.msra.mxu0 0.0
    %1346 = vmatprep.subr.mxu0 0.0
    %1347 = vmatpush1.msra.mxu0 0.0
    %1348 = vmatprep.subr.mxu0 0.0
    %1349 = vmatpush1.msra.mxu0 0.0
    %1350 = vmatprep.subr.mxu0 0.0
    %1351 = vmatpush1.msra.mxu0 0.0
    %1352 = vmatprep.subr.mxu0 0.0
    %1353 = vmatpush1.msra.mxu0 0.0
    %1354 = vmatprep.subr.mxu0 0.0
    %1355 = vmatpush1.msra.mxu0 0.0
    %1356 = vmatprep.subr.mxu0 0.0
    %1357 = vmatpush1.msra.mxu0 0.0
    %1358 = vmatprep.subr.mxu0 0.0
    %1359 = vmatpush1.msra.mxu0 0.0
    %1360 = vmatprep.subr.mxu0 0.0
    %1361 = vmatpush1.msra.mxu0 0.0
    %1362 = vmatprep.subr.mxu0 0.0
    %1363 = vmatpush1.msra.mxu0 0.0
    %1364 = vmatprep.subr.mxu0 0.0
    %1365 = vmatpush1.msra.mxu0 0.0
    %1366 = vmatprep.subr.mxu0 0.0
    %1367 = vmatpush1.msra.mxu0 0.0
    %1368 = vmatprep.subr.mxu0 0.0
    %1369 = vmatpush1.msra.mxu0 0.0
    %1370 = vmatprep.subr.mxu0 0.0
    %1371 = vmatpush1.msra.mxu0 0.0
    %1372 = vmatprep.subr.mxu0 0.0
    %1373 = vmatpush1.msra.mxu0 0.0
    %1374 = vmatprep.mubr.f32.mxu0 0.0
    %1375 = vmatmul.mubr.f32.gmra.mrb[0].mxu0 %v108
    %v1376 = vpop.f32.mrb[0].mxu0
    %v1377 = vadd.f32 0.0, %v1376
    %v1378 = vpop.f32.mrb[0].mxu0
    %v1379 = vadd.f32 0.0, %v1378
    %1380 = vmatprep.mubr.f32.mxu0 0.0
    %1381 = vmatmul.mubr.f32.gmra.mrb[0].mxu0 %v109
    %v1382 = vpop.f32.mrb[0].mxu0
    %v1383 = vadd.f32 0.0, %v1382
    %v1384 = vpop.f32.mrb[0].mxu0
    %v1385 = vadd.f32 0.0, %v1384
    %1386 = vmatprep.mubr.f32.mxu0 0.0
    %1387 = vmatmul.mubr.f32.gmra.mrb[0].mxu0 %v110
    %v1388 = vpop.f32.mrb[0].mxu0
    %v1389 = vadd.f32 0.0, %v1388
    %v1390 = vpop.f32.mrb[0].mxu0
    %v1391 = vadd.f32 0.0, %v1390
    %1392 = vmatprep.mubr.f32.mxu0 0.0
    %1393 = vmatmul.mubr.f32.gmra.mrb[0].mxu0 %v111
    %v1394 = vpop.f32.mrb[0].mxu0
    %v1395 = vadd.f32 0.0, %v1394
    %v1396 = vpop.f32.mrb[0].mxu0
    %v1397 = vadd.f32 0.0, %v1396
    %1398 = vdwg.mxu0
    %1399 = vmatprep.subr.mxu0 %v732
    %1400 = vmatpush1.msra.mxu0 %v731
    %1401 = vmatprep.subr.mxu0 %v748
    %1402 = vmatpush1.msra.mxu0 %v747
    %1403 = vmatprep.subr.mxu0 %v764
    %1404 = vmatpush1.msra.mxu0 %v763
    %1405 = vmatprep.subr.mxu0 %v780
    %1406 = vmatpush1.msra.mxu0 %v779
    %1407 = vmatprep.subr.mxu0 %v796
    %1408 = vmatpush1.msra.mxu0 %v795
    %1409 = vmatprep.subr.mxu0 %v812
    %1410 = vmatpush1.msra.mxu0 %v811
    %1411 = vmatprep.subr.mxu0 %v828
    %1412 = vmatpush1.msra.mxu0 %v827
    %1413 = vmatprep.subr.mxu0 %v844
    %1414 = vmatpush1.msra.mxu0 %v843
    %1415 = vmatprep.subr.mxu0 %v860
    %1416 = vmatpush1.msra.mxu0 %v859
    %1417 = vmatprep.subr.mxu0 %v876
    %1418 = vmatpush1.msra.mxu0 %v875
    %1419 = vmatprep.subr.mxu0 %v892
    %1420 = vmatpush1.msra.mxu0 %v891
    %1421 = vmatprep.subr.mxu0 %v908
    %1422 = vmatpush1.msra.mxu0 %v907
    %1423 = vmatprep.subr.mxu0 %v924
    %1424 = vmatpush1.msra.mxu0 %v923
    %1425 = vmatprep.subr.mxu0 %v940
    %1426 = vmatpush1.msra.mxu0 %v939
    %1427 = vmatprep.subr.mxu0 %v956
    %1428 = vmatpush1.msra.mxu0 %v955
    %1429 = vmatprep.subr.mxu0 %v972
    %1430 = vmatpush1.msra.mxu0 %v971
    %1431 = vmatprep.subr.mxu0 0.0
    %1432 = vmatpush1.msra.mxu0 0.0
    %1433 = vmatprep.subr.mxu0 0.0
    %1434 = vmatpush1.msra.mxu0 0.0
    %1435 = vmatprep.subr.mxu0 0.0
    %1436 = vmatpush1.msra.mxu0 0.0
    %1437 = vmatprep.subr.mxu0 0.0
    %1438 = vmatpush1.msra.mxu0 0.0
    %1439 = vmatprep.subr.mxu0 0.0
    %1440 = vmatpush1.msra.mxu0 0.0
    %1441 = vmatprep.subr.mxu0 0.0
    %1442 = vmatpush1.msra.mxu0 0.0
    %1443 = vmatprep.subr.mxu0 0.0
    %1444 = vmatpush1.msra.mxu0 0.0
    %1445 = vmatprep.subr.mxu0 0.0
    %1446 = vmatpush1.msra.mxu0 0.0
    %1447 = vmatprep.subr.mxu0 0.0
    %1448 = vmatpush1.msra.mxu0 0.0
    %1449 = vmatprep.subr.mxu0 0.0
    %1450 = vmatpush1.msra.mxu0 0.0
    %1451 = vmatprep.subr.mxu0 0.0
    %1452 = vmatpush1.msra.mxu0 0.0
    %1453 = vmatprep.subr.mxu0 0.0
    %1454 = vmatpush1.msra.mxu0 0.0
    %1455 = vmatprep.subr.mxu0 0.0
    %1456 = vmatpush1.msra.mxu0 0.0
    %1457 = vmatprep.subr.mxu0 0.0
    %1458 = vmatpush1.msra.mxu0 0.0
    %1459 = vmatprep.subr.mxu0 0.0
    %1460 = vmatpush1.msra.mxu0 0.0
    %1461 = vmatprep.subr.mxu0 0.0
    %1462 = vmatpush1.msra.mxu0 0.0
    %1463 = vmatprep.mubr.f32.mxu0 0.0
    %1464 = vmatmul.mubr.f32.gmra.mrb[0].mxu0 %v108
    %v1465 = vpop.f32.mrb[0].mxu0
    %v1466 = vadd.f32 0.0, %v1465
    %v1467 = vpop.f32.mrb[0].mxu0
    %v1468 = vadd.f32 0.0, %v1467
    %1469 = vmatprep.mubr.f32.mxu0 0.0
    %1470 = vmatmul.mubr.f32.gmra.mrb[0].mxu0 %v109
    %v1471 = vpop.f32.mrb[0].mxu0
    %v1472 = vadd.f32 0.0, %v1471
    %v1473 = vpop.f32.mrb[0].mxu0
    %v1474 = vadd.f32 0.0, %v1473
    %1475 = vmatprep.mubr.f32.mxu0 0.0
    %1476 = vmatmul.mubr.f32.gmra.mrb[0].mxu0 %v110
    %v1477 = vpop.f32.mrb[0].mxu0
    %v1478 = vadd.f32 0.0, %v1477
    %v1479 = vpop.f32.mrb[0].mxu0
    %v1480 = vadd.f32 0.0, %v1479
    %1481 = vmatprep.mubr.f32.mxu0 0.0
    %1482 = vmatmul.mubr.f32.gmra.mrb[0].mxu0 %v111
    %v1483 = vpop.f32.mrb[0].mxu0
    %v1484 = vadd.f32 0.0, %v1483
    %v1485 = vpop.f32.mrb[0].mxu0
    %v1486 = vadd.f32 0.0, %v1485
    %1487 = vdwg.mxu0
    %1488 = vmatprep.subr.mxu0 %v734
    %1489 = vmatpush1.msra.mxu0 %v733
    %1490 = vmatprep.subr.mxu0 %v750
    %1491 = vmatpush1.msra.mxu0 %v749
    %1492 = vmatprep.subr.mxu0 %v766
    %1493 = vmatpush1.msra.mxu0 %v765
    %1494 = vmatprep.subr.mxu0 %v782
    %1495 = vmatpush1.msra.mxu0 %v781
    %1496 = vmatprep.subr.mxu0 %v798
    %1497 = vmatpush1.msra.mxu0 %v797
    %1498 = vmatprep.subr.mxu0 %v814
    %1499 = vmatpush1.msra.mxu0 %v813
    %1500 = vmatprep.subr.mxu0 %v830
    %1501 = vmatpush1.msra.mxu0 %v829
    %1502 = vmatprep.subr.mxu0 %v846
    %1503 = vmatpush1.msra.mxu0 %v845
    %1504 = vmatprep.subr.mxu0 %v862
    %1505 = vmatpush1.msra.mxu0 %v861
    %1506 = vmatprep.subr.mxu0 %v878
    %1507 = vmatpush1.msra.mxu0 %v877
    %1508 = vmatprep.subr.mxu0 %v894
    %1509 = vmatpush1.msra.mxu0 %v893
    %1510 = vmatprep.subr.mxu0 %v910
    %1511 = vmatpush1.msra.mxu0 %v909
    %1512 = vmatprep.subr.mxu0 %v926
    %1513 = vmatpush1.msra.mxu0 %v925
    %1514 = vmatprep.subr.mxu0 %v942
    %1515 = vmatpush1.msra.mxu0 %v941
    %1516 = vmatprep.subr.mxu0 %v958
    %1517 = vmatpush1.msra.mxu0 %v957
    %1518 = vmatprep.subr.mxu0 %v974
    %1519 = vmatpush1.msra.mxu0 %v973
    %1520 = vmatprep.subr.mxu0 0.0
    %1521 = vmatpush1.msra.mxu0 0.0
    %1522 = vmatprep.subr.mxu0 0.0
    %1523 = vmatpush1.msra.mxu0 0.0
    %1524 = vmatprep.subr.mxu0 0.0
    %1525 = vmatpush1.msra.mxu0 0.0
    %1526 = vmatprep.subr.mxu0 0.0
    %1527 = vmatpush1.msra.mxu0 0.0
    %1528 = vmatprep.subr.mxu0 0.0
    %1529 = vmatpush1.msra.mxu0 0.0
    %1530 = vmatprep.subr.mxu0 0.0
    %1531 = vmatpush1.msra.mxu0 0.0
    %1532 = vmatprep.subr.mxu0 0.0
    %1533 = vmatpush1.msra.mxu0 0.0
    %1534 = vmatprep.subr.mxu0 0.0
    %1535 = vmatpush1.msra.mxu0 0.0
    %1536 = vmatprep.subr.mxu0 0.0
    %1537 = vmatpush1.msra.mxu0 0.0
    %1538 = vmatprep.subr.mxu0 0.0
    %1539 = vmatpush1.msra.mxu0 0.0
    %1540 = vmatprep.subr.mxu0 0.0
    %1541 = vmatpush1.msra.mxu0 0.0
    %1542 = vmatprep.subr.mxu0 0.0
    %1543 = vmatpush1.msra.mxu0 0.0
    %1544 = vmatprep.subr.mxu0 0.0
    %1545 = vmatpush1.msra.mxu0 0.0
    %1546 = vmatprep.subr.mxu0 0.0
    %1547 = vmatpush1.msra.mxu0 0.0
    %1548 = vmatprep.subr.mxu0 0.0
    %1549 = vmatpush1.msra.mxu0 0.0
    %1550 = vmatprep.subr.mxu0 0.0
    %1551 = vmatpush1.msra.mxu0 0.0
    %1552 = vmatprep.mubr.f32.mxu0 0.0
    %1553 = vmatmul.mubr.f32.gmra.mrb[0].mxu0 %v108
    %v1554 = vpop.f32.mrb[0].mxu0
    %v1555 = vadd.f32 0.0, %v1554
    %v1556 = vpop.f32.mrb[0].mxu0
    %v1557 = vadd.f32 0.0, %v1556
    %1558 = vmatprep.mubr.f32.mxu0 0.0
    %1559 = vmatmul.mubr.f32.gmra.mrb[0].mxu0 %v109
    %v1560 = vpop.f32.mrb[0].mxu0
    %v1561 = vadd.f32 0.0, %v1560
    %v1562 = vpop.f32.mrb[0].mxu0
    %v1563 = vadd.f32 0.0, %v1562
    %1564 = vmatprep.mubr.f32.mxu0 0.0
    %1565 = vmatmul.mubr.f32.gmra.mrb[0].mxu0 %v110
    %v1566 = vpop.f32.mrb[0].mxu0
    %v1567 = vadd.f32 0.0, %v1566
    %v1568 = vpop.f32.mrb[0].mxu0
    %v1569 = vadd.f32 0.0, %v1568
    %1570 = vmatprep.mubr.f32.mxu0 0.0
    %1571 = vmatmul.mubr.f32.gmra.mrb[0].mxu0 %v111
    %v1572 = vpop.f32.mrb[0].mxu0
    %v1573 = vadd.f32 0.0, %v1572
    %v1574 = vpop.f32.mrb[0].mxu0
    %v1575 = vadd.f32 0.0, %v1574
    %1576 = vdwg.mxu0
    %1577 = vmatprep.subr.mxu0 %v736
    %1578 = vmatpush1.msra.mxu0 %v735
    %1579 = vmatprep.subr.mxu0 %v752
    %1580 = vmatpush1.msra.mxu0 %v751
    %1581 = vmatprep.subr.mxu0 %v768
    %1582 = vmatpush1.msra.mxu0 %v767
    %1583 = vmatprep.subr.mxu0 %v784
    %1584 = vmatpush1.msra.mxu0 %v783
    %1585 = vmatprep.subr.mxu0 %v800
    %1586 = vmatpush1.msra.mxu0 %v799
    %1587 = vmatprep.subr.mxu0 %v816
    %1588 = vmatpush1.msra.mxu0 %v815
    %1589 = vmatprep.subr.mxu0 %v832
    %1590 = vmatpush1.msra.mxu0 %v831
    %1591 = vmatprep.subr.mxu0 %v848
    %1592 = vmatpush1.msra.mxu0 %v847
    %1593 = vmatprep.subr.mxu0 %v864
    %1594 = vmatpush1.msra.mxu0 %v863
    %1595 = vmatprep.subr.mxu0 %v880
    %1596 = vmatpush1.msra.mxu0 %v879
    %1597 = vmatprep.subr.mxu0 %v896
    %1598 = vmatpush1.msra.mxu0 %v895
    %1599 = vmatprep.subr.mxu0 %v912
    %1600 = vmatpush1.msra.mxu0 %v911
    %1601 = vmatprep.subr.mxu0 %v928
    %1602 = vmatpush1.msra.mxu0 %v927
    %1603 = vmatprep.subr.mxu0 %v944
    %1604 = vmatpush1.msra.mxu0 %v943
    %1605 = vmatprep.subr.mxu0 %v960
    %1606 = vmatpush1.msra.mxu0 %v959
    %1607 = vmatprep.subr.mxu0 %v976
    %1608 = vmatpush1.msra.mxu0 %v975
    %1609 = vmatprep.subr.mxu0 0.0
    %1610 = vmatpush1.msra.mxu0 0.0
    %1611 = vmatprep.subr.mxu0 0.0
    %1612 = vmatpush1.msra.mxu0 0.0
    %1613 = vmatprep.subr.mxu0 0.0
    %1614 = vmatpush1.msra.mxu0 0.0
    %1615 = vmatprep.subr.mxu0 0.0
    %1616 = vmatpush1.msra.mxu0 0.0
    %1617 = vmatprep.subr.mxu0 0.0
    %1618 = vmatpush1.msra.mxu0 0.0
    %1619 = vmatprep.subr.mxu0 0.0
    %1620 = vmatpush1.msra.mxu0 0.0
    %1621 = vmatprep.subr.mxu0 0.0
    %1622 = vmatpush1.msra.mxu0 0.0
    %1623 = vmatprep.subr.mxu0 0.0
    %1624 = vmatpush1.msra.mxu0 0.0
    %1625 = vmatprep.subr.mxu0 0.0
    %1626 = vmatpush1.msra.mxu0 0.0
    %1627 = vmatprep.subr.mxu0 0.0
    %1628 = vmatpush1.msra.mxu0 0.0
    %1629 = vmatprep.subr.mxu0 0.0
    %1630 = vmatpush1.msra.mxu0 0.0
    %1631 = vmatprep.subr.mxu0 0.0
    %1632 = vmatpush1.msra.mxu0 0.0
    %1633 = vmatprep.subr.mxu0 0.0
    %1634 = vmatpush1.msra.mxu0 0.0
    %1635 = vmatprep.subr.mxu0 0.0
    %1636 = vmatpush1.msra.mxu0 0.0
    %1637 = vmatprep.subr.mxu0 0.0
    %1638 = vmatpush1.msra.mxu0 0.0
    %1639 = vmatprep.subr.mxu0 0.0
    %1640 = vmatpush1.msra.mxu0 0.0
    %1641 = vmatprep.mubr.f32.mxu0 0.0
    %1642 = vmatmul.mubr.f32.gmra.mrb[0].mxu0 %v108
    %v1643 = vpop.f32.mrb[0].mxu0
    %v1644 = vadd.f32 0.0, %v1643
    %v1645 = vpop.f32.mrb[0].mxu0
    %v1646 = vadd.f32 0.0, %v1645
    %1647 = vmatprep.mubr.f32.mxu0 0.0
    %1648 = vmatmul.mubr.f32.gmra.mrb[0].mxu0 %v109
    %v1649 = vpop.f32.mrb[0].mxu0
    %v1650 = vadd.f32 0.0, %v1649
    %v1651 = vpop.f32.mrb[0].mxu0
    %v1652 = vadd.f32 0.0, %v1651
    %1653 = vmatprep.mubr.f32.mxu0 0.0
    %1654 = vmatmul.mubr.f32.gmra.mrb[0].mxu0 %v110
    %v1655 = vpop.f32.mrb[0].mxu0
    %v1656 = vadd.f32 0.0, %v1655
    %v1657 = vpop.f32.mrb[0].mxu0
    %v1658 = vadd.f32 0.0, %v1657
    %1659 = vmatprep.mubr.f32.mxu0 0.0
    %1660 = vmatmul.mubr.f32.gmra.mrb[0].mxu0 %v111
    %v1661 = vpop.f32.mrb[0].mxu0
    %v1662 = vadd.f32 0.0, %v1661
    %v1663 = vpop.f32.mrb[0].mxu0
    %v1664 = vadd.f32 0.0, %v1663
    %1665 = vdwg.mxu0
    %1666 = vmatprep.subr.mxu0 %v738
    %1667 = vmatpush1.msra.mxu0 %v737
    %1668 = vmatprep.subr.mxu0 %v754
    %1669 = vmatpush1.msra.mxu0 %v753
    %1670 = vmatprep.subr.mxu0 %v770
    %1671 = vmatpush1.msra.mxu0 %v769
    %1672 = vmatprep.subr.mxu0 %v786
    %1673 = vmatpush1.msra.mxu0 %v785
    %1674 = vmatprep.subr.mxu0 %v802
    %1675 = vmatpush1.msra.mxu0 %v801
    %1676 = vmatprep.subr.mxu0 %v818
    %1677 = vmatpush1.msra.mxu0 %v817
    %1678 = vmatprep.subr.mxu0 %v834
    %1679 = vmatpush1.msra.mxu0 %v833
    %1680 = vmatprep.subr.mxu0 %v850
    %1681 = vmatpush1.msra.mxu0 %v849
    %1682 = vmatprep.subr.mxu0 %v866
    %1683 = vmatpush1.msra.mxu0 %v865
    %1684 = vmatprep.subr.mxu0 %v882
    %1685 = vmatpush1.msra.mxu0 %v881
    %1686 = vmatprep.subr.mxu0 %v898
    %1687 = vmatpush1.msra.mxu0 %v897
    %1688 = vmatprep.subr.mxu0 %v914
    %1689 = vmatpush1.msra.mxu0 %v913
    %1690 = vmatprep.subr.mxu0 %v930
    %1691 = vmatpush1.msra.mxu0 %v929
    %1692 = vmatprep.subr.mxu0 %v946
    %1693 = vmatpush1.msra.mxu0 %v945
    %1694 = vmatprep.subr.mxu0 %v962
    %1695 = vmatpush1.msra.mxu0 %v961
    %1696 = vmatprep.subr.mxu0 %v978
    %1697 = vmatpush1.msra.mxu0 %v977
    %1698 = vmatprep.subr.mxu0 0.0
    %1699 = vmatpush1.msra.mxu0 0.0
    %1700 = vmatprep.subr.mxu0 0.0
    %1701 = vmatpush1.msra.mxu0 0.0
    %1702 = vmatprep.subr.mxu0 0.0
    %1703 = vmatpush1.msra.mxu0 0.0
    %1704 = vmatprep.subr.mxu0 0.0
    %1705 = vmatpush1.msra.mxu0 0.0
    %1706 = vmatprep.subr.mxu0 0.0
    %1707 = vmatpush1.msra.mxu0 0.0
    %1708 = vmatprep.subr.mxu0 0.0
    %1709 = vmatpush1.msra.mxu0 0.0
    %1710 = vmatprep.subr.mxu0 0.0
    %1711 = vmatpush1.msra.mxu0 0.0
    %1712 = vmatprep.subr.mxu0 0.0
    %1713 = vmatpush1.msra.mxu0 0.0
    %1714 = vmatprep.subr.mxu0 0.0
    %1715 = vmatpush1.msra.mxu0 0.0
    %1716 = vmatprep.subr.mxu0 0.0
    %1717 = vmatpush1.msra.mxu0 0.0
    %1718 = vmatprep.subr.mxu0 0.0
    %1719 = vmatpush1.msra.mxu0 0.0
    %1720 = vmatprep.subr.mxu0 0.0
    %1721 = vmatpush1.msra.mxu0 0.0
    %1722 = vmatprep.subr.mxu0 0.0
    %1723 = vmatpush1.msra.mxu0 0.0
    %1724 = vmatprep.subr.mxu0 0.0
    %1725 = vmatpush1.msra.mxu0 0.0
    %1726 = vmatprep.subr.mxu0 0.0
    %1727 = vmatpush1.msra.mxu0 0.0
    %1728 = vmatprep.subr.mxu0 0.0
    %1729 = vmatpush1.msra.mxu0 0.0
    %1730 = vmatprep.mubr.f32.mxu0 0.0
    %1731 = vmatmul.mubr.f32.gmra.mrb[0].mxu0 %v108
    %v1732 = vpop.f32.mrb[0].mxu0
    %v1733 = vadd.f32 0.0, %v1732
    %v1734 = vpop.f32.mrb[0].mxu0
    %v1735 = vadd.f32 0.0, %v1734
    %1736 = vmatprep.mubr.f32.mxu0 0.0
    %1737 = vmatmul.mubr.f32.gmra.mrb[0].mxu0 %v109
    %v1738 = vpop.f32.mrb[0].mxu0
    %v1739 = vadd.f32 0.0, %v1738
    %v1740 = vpop.f32.mrb[0].mxu0
    %v1741 = vadd.f32 0.0, %v1740
    %1742 = vmatprep.mubr.f32.mxu0 0.0
    %1743 = vmatmul.mubr.f32.gmra.mrb[0].mxu0 %v110
    %v1744 = vpop.f32.mrb[0].mxu0
    %v1745 = vadd.f32 0.0, %v1744
    %v1746 = vpop.f32.mrb[0].mxu0
    %v1747 = vadd.f32 0.0, %v1746
    %1748 = vmatprep.mubr.f32.mxu0 0.0
    %1749 = vmatmul.mubr.f32.gmra.mrb[0].mxu0 %v111
    %v1750 = vpop.f32.mrb[0].mxu0
    %v1751 = vadd.f32 0.0, %v1750
    %v1752 = vpop.f32.mrb[0].mxu0
    %v1753 = vadd.f32 0.0, %v1752
    %1754 = vdwg.mxu0
    %v1755 = vadd.f32 %v979, %v1110
    %v1756 = vadd.f32 %v980, %v1112
    %v1757 = vadd.f32 %v981, %v1199
    %v1758 = vadd.f32 %v982, %v1201
    %v1759 = vadd.f32 %v983, %v1288
    %v1760 = vadd.f32 %v984, %v1290
    %v1761 = vadd.f32 %v985, %v1377
    %v1762 = vadd.f32 %v986, %v1379
    %v1763 = vadd.f32 %v987, %v1466
    %v1764 = vadd.f32 %v988, %v1468
    %v1765 = vadd.f32 %v989, %v1555
    %v1766 = vadd.f32 %v990, %v1557
    %v1767 = vadd.f32 %v991, %v1644
    %v1768 = vadd.f32 %v992, %v1646
    %v1769 = vadd.f32 %v993, %v1733
    %v1770 = vadd.f32 %v994, %v1735
    %v1771 = vadd.f32 %v995, %v1116
    %v1772 = vadd.f32 %v996, %v1118
    %v1773 = vadd.f32 %v997, %v1205
    %v1774 = vadd.f32 %v998, %v1207
    %v1775 = vadd.f32 %v999, %v1294
    %v1776 = vadd.f32 %v1000, %v1296
    %v1777 = vadd.f32 %v1001, %v1383
    %v1778 = vadd.f32 %v1002, %v1385
    %v1779 = vadd.f32 %v1003, %v1472
    %v1780 = vadd.f32 %v1004, %v1474
    %v1781 = vadd.f32 %v1005, %v1561
    %v1782 = vadd.f32 %v1006, %v1563
    %v1783 = vadd.f32 %v1007, %v1650
    %v1784 = vadd.f32 %v1008, %v1652
    %v1785 = vadd.f32 %v1009, %v1739
    %v1786 = vadd.f32 %v1010, %v1741
    %v1787 = vadd.f32 %v1011, %v1122
    %v1788 = vadd.f32 %v1012, %v1124
    %v1789 = vadd.f32 %v1013, %v1211
    %v1790 = vadd.f32 %v1014, %v1213
    %v1791 = vadd.f32 %v1015, %v1300
    %v1792 = vadd.f32 %v1016, %v1302
    %v1793 = vadd.f32 %v1017, %v1389
    %v1794 = vadd.f32 %v1018, %v1391
    %v1795 = vadd.f32 %v1019, %v1478
    %v1796 = vadd.f32 %v1020, %v1480
    %v1797 = vadd.f32 %v1021, %v1567
    %v1798 = vadd.f32 %v1022, %v1569
    %v1799 = vadd.f32 %v1023, %v1656
    %v1800 = vadd.f32 %v1024, %v1658
    %v1801 = vadd.f32 %v1025, %v1745
    %v1802 = vadd.f32 %v1026, %v1747
    %v1803 = vadd.f32 %v1027, %v1128
    %v1804 = vadd.f32 %v1028, %v1130
    %v1805 = vadd.f32 %v1029, %v1217
    %v1806 = vadd.f32 %v1030, %v1219
    %v1807 = vadd.f32 %v1031, %v1306
    %v1808 = vadd.f32 %v1032, %v1308
    %v1809 = vadd.f32 %v1033, %v1395
    %v1810 = vadd.f32 %v1034, %v1397
    %v1811 = vadd.f32 %v1035, %v1484
    %v1812 = vadd.f32 %v1036, %v1486
    %v1813 = vadd.f32 %v1037, %v1573
    %v1814 = vadd.f32 %v1038, %v1575
    %v1815 = vadd.f32 %v1039, %v1662
    %v1816 = vadd.f32 %v1040, %v1664
    %v1817 = vadd.f32 %v1041, %v1751
    %v1818 = vadd.f32 %v1042, %v1753
    %1819 = vst [vmem:[#allocation2] sm:$0xff] %v1755
    %1820 = vst [vmem:[#allocation2 + $0x8] sm:$0xff] %v1756
    %1821 = vst [vmem:[#allocation2 + $0x10] sm:$0xff] %v1757
    %1822 = vst [vmem:[#allocation2 + $0x18] sm:$0xff] %v1758
    %1823 = vst [vmem:[#allocation2 + $0x20] sm:$0xff] %v1759
    %1824 = vst [vmem:[#allocation2 + $0x28] sm:$0xff] %v1760
    %1825 = vst [vmem:[#allocation2 + $0x30] sm:$0xff] %v1761
    %1826 = vst [vmem:[#allocation2 + $0x38] sm:$0xff] %v1762
    %1827 = vst [vmem:[#allocation2 + $0x40] sm:$0xff] %v1763
    %1828 = vst [vmem:[#allocation2 + $0x48] sm:$0xff] %v1764
    %1829 = vst [vmem:[#allocation2 + $0x50] sm:$0xff] %v1765
    %1830 = vst [vmem:[#allocation2 + $0x58] sm:$0xff] %v1766
    %1831 = vst [vmem:[#allocation2 + $0x60] sm:$0xff] %v1767
    %1832 = vst [vmem:[#allocation2 + $0x68] sm:$0xff] %v1768
    %1833 = vst [vmem:[#allocation2 + $0x70] sm:$0xff] %v1769
    %1834 = vst [vmem:[#allocation2 + $0x78] sm:$0xff] %v1770
    %1835 = vst [vmem:[#allocation2 + $0x80] sm:$0xff] %v1771
    %1836 = vst [vmem:[#allocation2 + $0x88] sm:$0xff] %v1772
    %1837 = vst [vmem:[#allocation2 + $0x90] sm:$0xff] %v1773
    %1838 = vst [vmem:[#allocation2 + $0x98] sm:$0xff] %v1774
    %1839 = vst [vmem:[#allocation2 + $0xa0] sm:$0xff] %v1775
    %1840 = vst [vmem:[#allocation2 + $0xa8] sm:$0xff] %v1776
    %1841 = vst [vmem:[#allocation2 + $0xb0] sm:$0xff] %v1777
    %1842 = vst [vmem:[#allocation2 + $0xb8] sm:$0xff] %v1778
    %1843 = vst [vmem:[#allocation2 + $0xc0] sm:$0xff] %v1779
    %1844 = vst [vmem:[#allocation2 + $0xc8] sm:$0xff] %v1780
    %1845 = vst [vmem:[#allocation2 + $0xd0] sm:$0xff] %v1781
    %1846 = vst [vmem:[#allocation2 + $0xd8] sm:$0xff] %v1782
    %1847 = vst [vmem:[#allocation2 + $0xe0] sm:$0xff] %v1783
    %1848 = vst [vmem:[#allocation2 + $0xe8] sm:$0xff] %v1784
    %1849 = vst [vmem:[#allocation2 + $0xf0] sm:$0xff] %v1785
    %1850 = vst [vmem:[#allocation2 + $0xf8] sm:$0xff] %v1786
    %1851 = vst [vmem:[#allocation2 + $0x100] sm:$0xff] %v1787
    %1852 = vst [vmem:[#allocation2 + $0x108] sm:$0xff] %v1788
    %1853 = vst [vmem:[#allocation2 + $0x110] sm:$0xff] %v1789
    %1854 = vst [vmem:[#allocation2 + $0x118] sm:$0xff] %v1790
    %1855 = vst [vmem:[#allocation2 + $0x120] sm:$0xff] %v1791
    %1856 = vst [vmem:[#allocation2 + $0x128] sm:$0xff] %v1792
    %1857 = vst [vmem:[#allocation2 + $0x130] sm:$0xff] %v1793
    %1858 = vst [vmem:[#allocation2 + $0x138] sm:$0xff] %v1794
    %1859 = vst [vmem:[#allocation2 + $0x140] sm:$0xff] %v1795
    %1860 = vst [vmem:[#allocation2 + $0x148] sm:$0xff] %v1796
    %1861 = vst [vmem:[#allocation2 + $0x150] sm:$0xff] %v1797
    %1862 = vst [vmem:[#allocation2 + $0x158] sm:$0xff] %v1798
    %1863 = vst [vmem:[#allocation2 + $0x160] sm:$0xff] %v1799
    %1864 = vst [vmem:[#allocation2 + $0x168] sm:$0xff] %v1800
    %1865 = vst [vmem:[#allocation2 + $0x170] sm:$0xff] %v1801
    %1866 = vst [vmem:[#allocation2 + $0x178] sm:$0xff] %v1802
    %1867 = vst [vmem:[#allocation2 + $0x180] sm:$0xff] %v1803
    %1868 = vst [vmem:[#allocation2 + $0x188] sm:$0xff] %v1804
    %1869 = vst [vmem:[#allocation2 + $0x190] sm:$0xff] %v1805
    %1870 = vst [vmem:[#allocation2 + $0x198] sm:$0xff] %v1806
    %1871 = vst [vmem:[#allocation2 + $0x1a0] sm:$0xff] %v1807
    %1872 = vst [vmem:[#allocation2 + $0x1a8] sm:$0xff] %v1808
    %1873 = vst [vmem:[#allocation2 + $0x1b0] sm:$0xff] %v1809
    %1874 = vst [vmem:[#allocation2 + $0x1b8] sm:$0xff] %v1810
    %1875 = vst [vmem:[#allocation2 + $0x1c0] sm:$0xff] %v1811
    %1876 = vst [vmem:[#allocation2 + $0x1c8] sm:$0xff] %v1812
    %1877 = vst [vmem:[#allocation2 + $0x1d0] sm:$0xff] %v1813
    %1878 = vst [vmem:[#allocation2 + $0x1d8] sm:$0xff] %v1814
    %1879 = vst [vmem:[#allocation2 + $0x1e0] sm:$0xff] %v1815
    %1880 = vst [vmem:[#allocation2 + $0x1e8] sm:$0xff] %v1816
    %1881 = vst [vmem:[#allocation2 + $0x1f0] sm:$0xff] %v1817
    %1882 = vst [vmem:[#allocation2 + $0x1f8] sm:$0xff] %v1818
    // Predicated region
    $region22: #{tpu_custom_call.1} parent=1 // pred_check
      %p1883 = pneg %p38
    $region23: #{tpu_custom_call.1} parent=1 // pred_check_branch
      %1885 = sbr.rel (%p1883) target = $region25
    $region24: #{tpu_custom_call.1} parent=1 // pred_region
      %v1886 = vld [vmem:[#allocation2] sm:$0xff]
      %v1887 = vld [vmem:[#allocation2 + $0x8] sm:$0xff]
      %v1888 = vld [vmem:[#allocation2 + $0x10] sm:$0xff]
      %v1889 = vld [vmem:[#allocation2 + $0x18] sm:$0xff]
      %v1890 = vld [vmem:[#allocation2 + $0x20] sm:$0xff]
      %v1891 = vld [vmem:[#allocation2 + $0x28] sm:$0xff]
      %v1892 = vld [vmem:[#allocation2 + $0x30] sm:$0xff]
      %v1893 = vld [vmem:[#allocation2 + $0x38] sm:$0xff]
      %v1894 = vld [vmem:[#allocation2 + $0x40] sm:$0xff]
      %v1895 = vld [vmem:[#allocation2 + $0x48] sm:$0xff]
      %v1896 = vld [vmem:[#allocation2 + $0x50] sm:$0xff]
      %v1897 = vld [vmem:[#allocation2 + $0x58] sm:$0xff]
      %v1898 = vld [vmem:[#allocation2 + $0x60] sm:$0xff]
      %v1899 = vld [vmem:[#allocation2 + $0x68] sm:$0xff]
      %v1900 = vld [vmem:[#allocation2 + $0x70] sm:$0xff]
      %v1901 = vld [vmem:[#allocation2 + $0x78] sm:$0xff]
      %v1902 = vld [vmem:[#allocation2 + $0x80] sm:$0xff]
      %v1903 = vld [vmem:[#allocation2 + $0x88] sm:$0xff]
      %v1904 = vld [vmem:[#allocation2 + $0x90] sm:$0xff]
      %v1905 = vld [vmem:[#allocation2 + $0x98] sm:$0xff]
      %v1906 = vld [vmem:[#allocation2 + $0xa0] sm:$0xff]
      %v1907 = vld [vmem:[#allocation2 + $0xa8] sm:$0xff]
      %v1908 = vld [vmem:[#allocation2 + $0xb0] sm:$0xff]
      %v1909 = vld [vmem:[#allocation2 + $0xb8] sm:$0xff]
      %v1910 = vld [vmem:[#allocation2 + $0xc0] sm:$0xff]
      %v1911 = vld [vmem:[#allocation2 + $0xc8] sm:$0xff]
      %v1912 = vld [vmem:[#allocation2 + $0xd0] sm:$0xff]
      %v1913 = vld [vmem:[#allocation2 + $0xd8] sm:$0xff]
      %v1914 = vld [vmem:[#allocation2 + $0xe0] sm:$0xff]
      %v1915 = vld [vmem:[#allocation2 + $0xe8] sm:$0xff]
      %v1916 = vld [vmem:[#allocation2 + $0xf0] sm:$0xff]
      %v1917 = vld [vmem:[#allocation2 + $0xf8] sm:$0xff]
      %v1918 = vld [vmem:[#allocation2 + $0x100] sm:$0xff]
      %v1919 = vld [vmem:[#allocation2 + $0x108] sm:$0xff]
      %v1920 = vld [vmem:[#allocation2 + $0x110] sm:$0xff]
      %v1921 = vld [vmem:[#allocation2 + $0x118] sm:$0xff]
      %v1922 = vld [vmem:[#allocation2 + $0x120] sm:$0xff]
      %v1923 = vld [vmem:[#allocation2 + $0x128] sm:$0xff]
      %v1924 = vld [vmem:[#allocation2 + $0x130] sm:$0xff]
      %v1925 = vld [vmem:[#allocation2 + $0x138] sm:$0xff]
      %v1926 = vld [vmem:[#allocation2 + $0x140] sm:$0xff]
      %v1927 = vld [vmem:[#allocation2 + $0x148] sm:$0xff]
      %v1928 = vld [vmem:[#allocation2 + $0x150] sm:$0xff]
      %v1929 = vld [vmem:[#allocation2 + $0x158] sm:$0xff]
      %v1930 = vld [vmem:[#allocation2 + $0x160] sm:$0xff]
      %v1931 = vld [vmem:[#allocation2 + $0x168] sm:$0xff]
      %v1932 = vld [vmem:[#allocation2 + $0x170] sm:$0xff]
      %v1933 = vld [vmem:[#allocation2 + $0x178] sm:$0xff]
      %v1934 = vld [vmem:[#allocation2 + $0x180] sm:$0xff]
      %v1935 = vld [vmem:[#allocation2 + $0x188] sm:$0xff]
      %v1936 = vld [vmem:[#allocation2 + $0x190] sm:$0xff]
      %v1937 = vld [vmem:[#allocation2 + $0x198] sm:$0xff]
      %v1938 = vld [vmem:[#allocation2 + $0x1a0] sm:$0xff]
      %v1939 = vld [vmem:[#allocation2 + $0x1a8] sm:$0xff]
      %v1940 = vld [vmem:[#allocation2 + $0x1b0] sm:$0xff]
      %v1941 = vld [vmem:[#allocation2 + $0x1b8] sm:$0xff]
      %v1942 = vld [vmem:[#allocation2 + $0x1c0] sm:$0xff]
      %v1943 = vld [vmem:[#allocation2 + $0x1c8] sm:$0xff]
      %v1944 = vld [vmem:[#allocation2 + $0x1d0] sm:$0xff]
      %v1945 = vld [vmem:[#allocation2 + $0x1d8] sm:$0xff]
      %v1946 = vld [vmem:[#allocation2 + $0x1e0] sm:$0xff]
      %v1947 = vld [vmem:[#allocation2 + $0x1e8] sm:$0xff]
      %v1948 = vld [vmem:[#allocation2 + $0x1f0] sm:$0xff]
      %v1949 = vld [vmem:[#allocation2 + $0x1f8] sm:$0xff]
      %v1950 = vmul.f32 %v1886, %v1894
      %v1951 = vmul.f32 %v1887, %v1895
      %v1952 = vmul.f32 %v1888, %v1896
      %v1953 = vmul.f32 %v1889, %v1897
      %v1954 = vmul.f32 %v1890, %v1898
      %v1955 = vmul.f32 %v1891, %v1899
      %v1956 = vmul.f32 %v1892, %v1900
      %v1957 = vmul.f32 %v1893, %v1901
      %v1958 = vmul.f32 %v1902, %v1910
      %v1959 = vmul.f32 %v1903, %v1911
      %v1960 = vmul.f32 %v1904, %v1912
      %v1961 = vmul.f32 %v1905, %v1913
      %v1962 = vmul.f32 %v1906, %v1914
      %v1963 = vmul.f32 %v1907, %v1915
      %v1964 = vmul.f32 %v1908, %v1916
      %v1965 = vmul.f32 %v1909, %v1917
      %v1966 = vmul.f32 %v1918, %v1926
      %v1967 = vmul.f32 %v1919, %v1927
      %v1968 = vmul.f32 %v1920, %v1928
      %v1969 = vmul.f32 %v1921, %v1929
      %v1970 = vmul.f32 %v1922, %v1930
      %v1971 = vmul.f32 %v1923, %v1931
      %v1972 = vmul.f32 %v1924, %v1932
      %v1973 = vmul.f32 %v1925, %v1933
      %v1974 = vmul.f32 %v1934, %v1942
      %v1975 = vmul.f32 %v1935, %v1943
      %v1976 = vmul.f32 %v1936, %v1944
      %v1977 = vmul.f32 %v1937, %v1945
      %v1978 = vmul.f32 %v1938, %v1946
      %v1979 = vmul.f32 %v1939, %v1947
      %v1980 = vmul.f32 %v1940, %v1948
      %v1981 = vmul.f32 %v1941, %v1949
      %v1982 = vadd.f32 %v1950, %v1958
      %v1983 = vadd.f32 %v1982, %v1966
      %v1984 = vadd.f32 %v1983, %v1974
      %v1985 = vrot.slane %v1984, 4
      %v1986 = vadd.f32 %v1984, %v1985
      %v1987 = vrot.slane %v1986, 2
      %v1988 = vadd.f32 %v1986, %v1987
      %v1989 = vrot.slane %v1988, 1
      %v1990 = vadd.f32 %v1988, %v1989
      %v1991 = vadd.f32 %v1951, %v1959
      %v1992 = vadd.f32 %v1991, %v1967
      %v1993 = vadd.f32 %v1992, %v1975
      %v1994 = vrot.slane %v1993, 4
      %v1995 = vadd.f32 %v1993, %v1994
      %v1996 = vrot.slane %v1995, 2
      %v1997 = vadd.f32 %v1995, %v1996
      %v1998 = vrot.slane %v1997, 1
      %v1999 = vadd.f32 %v1997, %v1998
      %v2000 = vadd.f32 %v1952, %v1960
      %v2001 = vadd.f32 %v2000, %v1968
      %v2002 = vadd.f32 %v2001, %v1976
      %v2003 = vrot.slane %v2002, 4
      %v2004 = vadd.f32 %v2002, %v2003
      %v2005 = vrot.slane %v2004, 2
      %v2006 = vadd.f32 %v2004, %v2005
      %v2007 = vrot.slane %v2006, 1
      %v2008 = vadd.f32 %v2006, %v2007
      %v2009 = vadd.f32 %v1953, %v1961
      %v2010 = vadd.f32 %v2009, %v1969
      %v2011 = vadd.f32 %v2010, %v1977
      %v2012 = vrot.slane %v2011, 4
      %v2013 = vadd.f32 %v2011, %v2012
      %v2014 = vrot.slane %v2013, 2
      %v2015 = vadd.f32 %v2013, %v2014
      %v2016 = vrot.slane %v2015, 1
      %v2017 = vadd.f32 %v2015, %v2016
      %v2018 = vadd.f32 %v1954, %v1962
      %v2019 = vadd.f32 %v2018, %v1970
      %v2020 = vadd.f32 %v2019, %v1978
      %v2021 = vrot.slane %v2020, 4
      %v2022 = vadd.f32 %v2020, %v2021
      %v2023 = vrot.slane %v2022, 2
      %v2024 = vadd.f32 %v2022, %v2023
      %v2025 = vrot.slane %v2024, 1
      %v2026 = vadd.f32 %v2024, %v2025
      %v2027 = vadd.f32 %v1955, %v1963
      %v2028 = vadd.f32 %v2027, %v1971
      %v2029 = vadd.f32 %v2028, %v1979
      %v2030 = vrot.slane %v2029, 4
      %v2031 = vadd.f32 %v2029, %v2030
      %v2032 = vrot.slane %v2031, 2
      %v2033 = vadd.f32 %v2031, %v2032
      %v2034 = vrot.slane %v2033, 1
      %v2035 = vadd.f32 %v2033, %v2034
      %v2036 = vadd.f32 %v1956, %v1964
      %v2037 = vadd.f32 %v2036, %v1972
      %v2038 = vadd.f32 %v2037, %v1980
      %v2039 = vrot.slane %v2038, 4
      %v2040 = vadd.f32 %v2038, %v2039
      %v2041 = vrot.slane %v2040, 2
      %v2042 = vadd.f32 %v2040, %v2041
      %v2043 = vrot.slane %v2042, 1
      %v2044 = vadd.f32 %v2042, %v2043
      %v2045 = vadd.f32 %v1957, %v1965
      %v2046 = vadd.f32 %v2045, %v1973
      %v2047 = vadd.f32 %v2046, %v1981
      %v2048 = vrot.slane %v2047, 4
      %v2049 = vadd.f32 %v2047, %v2048
      %v2050 = vrot.slane %v2049, 2
      %v2051 = vadd.f32 %v2049, %v2050
      %v2052 = vrot.slane %v2051, 1
      %v2053 = vadd.f32 %v2051, %v2052
      %v2054 = vxor.u32 %v1990, 2147483648
      %v2055 = vxor.u32 %v1999, 2147483648
      %v2056 = vxor.u32 %v2008, 2147483648
      %v2057 = vxor.u32 %v2017, 2147483648
      %v2058 = vxor.u32 %v2026, 2147483648
      %v2059 = vxor.u32 %v2035, 2147483648
      %v2060 = vxor.u32 %v2044, 2147483648
      %v2061 = vxor.u32 %v2053, 2147483648
      %v2062 = vmul.f32 %v2054, 1.442695
      %v2063 = vpow.pop %v2062
      %v2064 = vmul.f32 %v2055, 1.442695
      %v2065 = vpow.pop %v2064
      %v2066 = vmul.f32 %v2056, 1.442695
      %v2067 = vpow.pop %v2066
      %v2068 = vmul.f32 %v2057, 1.442695
      %v2069 = vpow.pop %v2068
      %v2070 = vmul.f32 %v2058, 1.442695
      %v2071 = vpow.pop %v2070
      %v2072 = vmul.f32 %v2059, 1.442695
      %v2073 = vpow.pop %v2072
      %v2074 = vmul.f32 %v2060, 1.442695
      %v2075 = vpow.pop %v2074
      %v2076 = vmul.f32 %v2061, 1.442695
      %v2077 = vpow.pop %v2076
      %v2078 = vadd.f32 %v2063, 1.0
      %v2079 = vadd.f32 %v2065, 1.0
      %v2080 = vadd.f32 %v2067, 1.0
      %v2081 = vadd.f32 %v2069, 1.0
      %v2082 = vadd.f32 %v2071, 1.0
      %v2083 = vadd.f32 %v2073, 1.0
      %v2084 = vadd.f32 %v2075, 1.0
      %v2085 = vadd.f32 %v2077, 1.0
      %v2086 = vrcp.pop %v2078
      %v2087 = vmul.f32 1.0, %v2086
      %v2088 = vrcp.pop %v2079
      %v2089 = vmul.f32 1.0, %v2088
      %v2090 = vrcp.pop %v2080
      %v2091 = vmul.f32 1.0, %v2090
      %v2092 = vrcp.pop %v2081
      %v2093 = vmul.f32 1.0, %v2092
      %v2094 = vrcp.pop %v2082
      %v2095 = vmul.f32 1.0, %v2094
      %v2096 = vrcp.pop %v2083
      %v2097 = vmul.f32 1.0, %v2096
      %v2098 = vrcp.pop %v2084
      %v2099 = vmul.f32 1.0, %v2098
      %v2100 = vrcp.pop %v2085
      %v2101 = vmul.f32 1.0, %v2100
      %v2110 = vcombine.low %v2087, %v2089
      %v2111 = vcombine.low %v2091, %v2093
      %v2112 = vcombine.low %v2095, %v2097
      %v2113 = vcombine.low %v2099, %v2101
      %v2115 = vunpack.c.l.s4 1966171168
      %v2116 = vunpack.c.0.s8 %v2115
      %v2117 = vlaneseq
      %v2118 = vshrl.u32 %v2117, 7
      %v2119 = vsub.s32 %v2116, %v2118
      %v2120 = vrot.slane %v2110, %v2119
      %v2122 = vunpack.c.l.s4 1966171168
      %v2123 = vunpack.c.0.s8 %v2122
      %v2124 = vlaneseq
      %v2125 = vshrl.u32 %v2124, 7
      %v2126 = vsub.s32 %v2123, %v2125
      %v2127 = vrot.slane %v2111, %v2126
      %v2129 = vunpack.c.l.s4 1966171168
      %v2130 = vunpack.c.0.s8 %v2129
      %v2131 = vlaneseq
      %v2132 = vshrl.u32 %v2131, 7
      %v2133 = vsub.s32 %v2130, %v2132
      %v2134 = vrot.slane %v2112, %v2133
      %v2136 = vunpack.c.l.s4 1966171168
      %v2137 = vunpack.c.0.s8 %v2136
      %v2138 = vlaneseq
      %v2139 = vshrl.u32 %v2138, 7
      %v2140 = vsub.s32 %v2137, %v2139
      %v2141 = vrot.slane %v2113, %v2140
      %v2142 = vcombine.low %v2120, %v2127
      %v2143 = vcombine.low %v2134, %v2141
      %v2145 = vunpack.c.l.s4 1966171168
      %v2146 = vunpack.c.0.s8 %v2145
      %v2147 = vlaneseq
      %v2148 = vshrl.u32 %v2147, 7
      %v2149 = vsub.s32 %v2146, %v2148
      %v2150 = vrot.slane %v2142, %v2149
      %v2152 = vunpack.c.l.s4 1966171168
      %v2153 = vunpack.c.0.s8 %v2152
      %v2154 = vlaneseq
      %v2155 = vshrl.u32 %v2154, 7
      %v2156 = vsub.s32 %v2153, %v2155
      %v2157 = vrot.slane %v2143, %v2156
      %v2158 = vcombine.low %v2150, %v2157
      %2160 = vst [vmem:[#allocation8] sm:$0xff] %v2158
    $region25: #{tpu_custom_call.1} parent=1 // pred_fallthru
      _
    // Predicated region
    $region26: #{tpu_custom_call.1} parent=1 // pred_check
      _
    $region27: #{tpu_custom_call.1} parent=1 // pred_check_branch
      %2162 = sbr.rel (0) target = $region29
    $region28: #{tpu_custom_call.1} parent=1 // pred_region
      %s2164 = ssub.s32 128, 128
      %2165 = vsyncadd [#allocation5], %s2164
      %s2167 = sshll.u32 [#allocation8], 4
      %s2168 = int_to_ptr.vmem [resolvable:$true] %s2167
      %2170 = dma.vmem_to_hbm [thread:$0]  %s2168, 128, %s2, [#allocation5]
    $region29: #{tpu_custom_call.1} parent=1 // pred_fallthru
      _
    // Predicated region
    $region30: #{tpu_custom_call.1} parent=1 // pred_check
      _
    $region31: #{tpu_custom_call.1} parent=1 // pred_check_branch
      %2172 = sbr.rel (0) target = $region33
    $region32: #{tpu_custom_call.1} parent=1 // pred_region
      %2173 = dma.done [#allocation5], 128
    $region33: #{tpu_custom_call.1} parent=1 // pred_fallthru
      _
    %2174 = vsyncpa [#allocation4], 1
    %2175 = vsyncpa [#allocation7], 1
    %2176 = vsyncpa [#allocation5], 1

</llo_original>
